<compile_context>
chip_gen: v5e
topology: v5e:2x2
jax: 0.10.0
libtpu: 0.0.40
codegen_flags: <defaults>
</compile_context>

<pallas_src>
from functools import partial

import jax
import jax.numpy as jnp
from jax.experimental import pallas as pl
from jax.experimental.pallas import tpu as pltpu


def _residual_ff_kernel(x_ref, w1_ref, b1_ref, w2_ref, b2_ref, o_ref):
    # x_ref: (tm, Dp) f32   w1_ref: (Dp, Hp) bf16   b1_ref: (1, Hp) f32
    # w2_ref: (Hp, Dp) bf16 b2_ref: (1, Dp) f32     o_ref: (tm, Dp) f32
    x = x_ref[...]                                        # f32, reused for residual
    h = jnp.dot(x.astype(jnp.bfloat16), w1_ref[...],
                preferred_element_type=jnp.float32)       # MXU bf16, f32 acc
    h = jax.nn.gelu(h + b1_ref[...], approximate=True)    # f32 epilogue (EUP tanh)
    # TODO(synk): PyTorch nn.GELU defaults to the exact erf form; the tanh
    # approximation is used here (matches the in-file reference).
    y = jnp.dot(h.astype(jnp.bfloat16), w2_ref[...],
                preferred_element_type=jnp.float32)       # MXU bf16, f32 acc
    o_ref[...] = (y + b2_ref[...] + x).astype(o_ref.dtype)  # bias + residual in f32


def _round_up(v, m):
    return (v + m - 1) // m * m


@partial(jax.jit, static_argnames=("tm", "single_buffer_weights"))
def _residual_ff_impl(x, w1, b1, w2, b2, *, tm, single_buffer_weights):
    B, N, D = x.shape
    H = w1.shape[1]
    T = B * N
    Dp = _round_up(D, 128)   # lane-dense features / output stores
    Hp = _round_up(H, 128)
    Tp = _round_up(T, tm)    # ragged token count handled by zero-padding

    # Zero padding is exact: padded H columns see zero weights/bias -> gelu(0)=0,
    # padded D columns / token rows are sliced off below.
    x2 = jnp.pad(x.reshape(T, D), ((0, Tp - T), (0, Dp - D)))
    w1p = jnp.pad(w1, ((0, Dp - D), (0, Hp - H))).astype(jnp.bfloat16)
    w2p = jnp.pad(w2, ((0, Hp - H), (0, Dp - D))).astype(jnp.bfloat16)
    b1p = jnp.pad(b1, (0, Hp - H)).reshape(1, Hp).astype(jnp.float32)
    b2p = jnp.pad(b2, (0, Dp - D)).reshape(1, Dp).astype(jnp.float32)

    # VMEM budget: resident bf16 weights (+ f32 biases) and double-buffered
    # f32 x/out token tiles, with headroom.
    n_wbuf = 1 if single_buffer_weights else 2
    footprint = (
        n_wbuf * (Dp * Hp + Hp * Dp) * 2     # bf16 weights
        + n_wbuf * (Hp + Dp) * 4             # f32 biases
        + 2 * 2 * tm * Dp * 4                # x + out tiles, double-buffered
    )
    vmem_limit = int(min(max(2 * footprint, 32 << 20), 96 << 20))
    # TODO(synk): for very large H (bf16 weights > ~48 MiB, e.g. on v7x's 64 MiB
    # VMEM) add a second "arbitrary" grid axis over H with an f32 accumulator
    # scratch instead of keeping the full (Dp,Hp)/(Hp,Dp) weights resident.

    if single_buffer_weights:
        def const_spec(shape):
            # Block index never changes across the grid -> one buffer is enough.
            return pl.BlockSpec(shape, lambda i: (0, 0),
                                pipeline_mode=pl.Buffered(1))
    else:
        def const_spec(shape):
            return pl.BlockSpec(shape, lambda i: (0, 0))

    out = pl.pallas_call(
        _residual_ff_kernel,
        out_shape=jax.ShapeDtypeStruct((Tp, Dp), x.dtype),
        grid_spec=pltpu.PrefetchScalarGridSpec(
            num_scalar_prefetch=0,
            grid=(Tp // tm,),
            in_specs=[
                pl.BlockSpec((tm, Dp), lambda i: (i, 0)),   # x tile
                const_spec((Dp, Hp)),                       # w1 (resident)
                const_spec((1, Hp)),                        # b1
                const_spec((Hp, Dp)),                       # w2 (resident)
                const_spec((1, Dp)),                        # b2
            ],
            out_specs=pl.BlockSpec((tm, Dp), lambda i: (i, 0)),
        ),
        compiler_params=pltpu.CompilerParams(
            dimension_semantics=("parallel",),   # megacore-shard the token axis
            vmem_limit_bytes=vmem_limit,
        ),
        input_output_aliases={0: 0},             # out reuses the padded-x buffer
    )(x2, w1p, b1p, w2p, b2p)

    return out[:T, :D].reshape(B, N, D)


def residual_feedforward(x, w1, b1, w2, b2, *, tm=256):
    """fn(x) + x with fn = Linear(D,H) -> GELU -> Linear(H,D).

    x: (B, N, D) float32; w1: (D, H); b1: (H,); w2: (H, D); b2: (D,).
    tm: token tile (>=128 useful on v5e, >=256 on v6e/v7x).
    """
    try:
        return _residual_ff_impl(x, w1, b1, w2, b2, tm=tm,
                                 single_buffer_weights=True)
    except Exception:
        # Fallback for JAX versions where pipeline_mode=pl.Buffered(1) is not
        # accepted on a top-level pallas_call BlockSpec.
        return _residual_ff_impl(x, w1, b1, w2, b2, tm=tm,
                                 single_buffer_weights=False)


def _reference(x, w1, b1, w2, b2):
    h = jnp.einsum("bnd,dh->bnh", x, w1) + b1
    h = jax.nn.gelu(h, approximate=True)
    y = jnp.einsum("bnh,hd->bnd", h, w2) + b2
    return y + x


if __name__ == "__main__":
    # Small transformer-like shapes: batch=2, seq=64, dim=32, hidden=64.
    B, N, D, H = 2, 64, 32, 64
    key = jax.random.PRNGKey(0)
    kx, k1, k2, k3, k4 = jax.random.split(key, 5)

    x = jax.random.normal(kx, (B, N, D), dtype=jnp.float32)
    # Deterministic synthetic parameters for fn = Linear(D,H) -> GELU -> Linear(H,D)
    w1 = jax.random.normal(k1, (D, H), dtype=jnp.float32) * (1.0 / (D ** 0.5))
    b1 = jax.random.normal(k2, (H,), dtype=jnp.float32) * 0.01
    w2 = jax.random.normal(k3, (H, D), dtype=jnp.float32) * (1.0 / (H ** 0.5))
    b2 = jax.random.normal(k4, (D,), dtype=jnp.float32) * 0.01

    out = residual_feedforward(x, w1, b1, w2, b2, tm=256)
    out = jax.block_until_ready(out)

    ref = _reference(x, w1, b1, w2, b2)
    assert out.shape == x.shape and out.dtype == x.dtype
    # bf16 MXU operands -> loosened tolerance vs the pure-f32 reference.
    assert jnp.allclose(out, ref, atol=1e-1, rtol=5e-2), "mismatch vs reference"

    print("KERNEL_OK")
</pallas_src>

<mosaic_0001>
module attributes {stable_mosaic.version = 11 : i64} {
  func.func @_residual_ff_kernel(%arg0: i32, %arg1: memref<256x128xf32, #tpu.memory_space<vmem>>, %arg2: memref<128x128xbf16, #tpu.memory_space<vmem>>, %arg3: memref<1x128xf32, #tpu.memory_space<vmem>>, %arg4: memref<128x128xbf16, #tpu.memory_space<vmem>>, %arg5: memref<1x128xf32, #tpu.memory_space<vmem>>, %arg6: memref<256x128xf32, #tpu.memory_space<vmem>>) attributes {dimension_semantics = [#tpu.dimension_semantics<parallel>], iteration_bounds = array<i64: 1>, scalar_prefetch = 0 : i64, scratch_operands = 0 : i64, tpu.core_type = #tpu.core_type<tc>, window_params = [{transform_indices = @transform_0, window_bounds = array<i64: 256, 128>}, {pipeline_mode = #tpu.pipeline_mode<synchronous>, transform_indices = @transform_1, window_bounds = array<i64: 128, 128>}, {pipeline_mode = #tpu.pipeline_mode<synchronous>, transform_indices = @transform_2, window_bounds = array<i64: 1, 128>}, {pipeline_mode = #tpu.pipeline_mode<synchronous>, transform_indices = @transform_3, window_bounds = array<i64: 128, 128>}, {pipeline_mode = #tpu.pipeline_mode<synchronous>, transform_indices = @transform_4, window_bounds = array<i64: 1, 128>}, {transform_indices = @transform_5, window_bounds = array<i64: 256, 128>}]} {
    %c0 = arith.constant 0 : index
    %c0_0 = arith.constant 0 : index
    %0 = vector.load %arg1[%c0, %c0_0] : memref<256x128xf32, #tpu.memory_space<vmem>>, vector<256x128xf32>
    %1 = arith.truncf %0 : vector<256x128xf32> to vector<256x128xbf16>
    %c0_1 = arith.constant 0 : index
    %c0_2 = arith.constant 0 : index
    %2 = vector.load %arg2[%c0_1, %c0_2] : memref<128x128xbf16, #tpu.memory_space<vmem>>, vector<128x128xbf16>
    %cst = arith.constant dense<0.000000e+00> : vector<256x128xf32>
    %3 = tpu.matmul %1, %2, %cst {dimension_numbers = #tpu.dot_dimension_numbers<[1], [0], [0], [1], [0, 0, 1, 1], [], []>} : vector<256x128xbf16>, vector<128x128xbf16>, vector<256x128xf32> -> vector<256x128xf32>
    %c0_3 = arith.constant 0 : index
    %c0_4 = arith.constant 0 : index
    %4 = vector.load %arg3[%c0_3, %c0_4] : memref<1x128xf32, #tpu.memory_space<vmem>>, vector<1x128xf32>
    %5 = vector.broadcast %4 : vector<1x128xf32> to vector<256x128xf32>
    %6 = arith.addf %3, %5 : vector<256x128xf32>
    %7 = arith.mulf %6, %6 : vector<256x128xf32>
    %8 = arith.mulf %6, %7 : vector<256x128xf32>
    %cst_5 = arith.constant 4.471500e-02 : f32
    %9 = vector.broadcast %cst_5 : f32 to vector<256x128xf32>
    %10 = arith.mulf %9, %8 : vector<256x128xf32>
    %11 = arith.addf %6, %10 : vector<256x128xf32>
    %cst_6 = arith.constant 0.797884583 : f32
    %12 = vector.broadcast %cst_6 : f32 to vector<256x128xf32>
    %13 = arith.mulf %12, %11 : vector<256x128xf32>
    %14 = math.tanh %13 : vector<256x128xf32>
    %cst_7 = arith.constant 1.000000e+00 : f32
    %15 = vector.broadcast %cst_7 : f32 to vector<256x128xf32>
    %16 = arith.addf %15, %14 : vector<256x128xf32>
    %cst_8 = arith.constant 5.000000e-01 : f32
    %17 = vector.broadcast %cst_8 : f32 to vector<256x128xf32>
    %18 = arith.mulf %17, %16 : vector<256x128xf32>
    %19 = arith.mulf %6, %18 : vector<256x128xf32>
    %20 = arith.truncf %19 : vector<256x128xf32> to vector<256x128xbf16>
    %c0_9 = arith.constant 0 : index
    %c0_10 = arith.constant 0 : index
    %21 = vector.load %arg4[%c0_9, %c0_10] : memref<128x128xbf16, #tpu.memory_space<vmem>>, vector<128x128xbf16>
    %cst_11 = arith.constant dense<0.000000e+00> : vector<256x128xf32>
    %22 = tpu.matmul %20, %21, %cst_11 {dimension_numbers = #tpu.dot_dimension_numbers<[1], [0], [0], [1], [0, 0, 1, 1], [], []>} : vector<256x128xbf16>, vector<128x128xbf16>, vector<256x128xf32> -> vector<256x128xf32>
    %c0_12 = arith.constant 0 : index
    %c0_13 = arith.constant 0 : index
    %23 = vector.load %arg5[%c0_12, %c0_13] : memref<1x128xf32, #tpu.memory_space<vmem>>, vector<1x128xf32>
    %24 = vector.broadcast %23 : vector<1x128xf32> to vector<256x128xf32>
    %25 = arith.addf %22, %24 : vector<256x128xf32>
    %26 = arith.addf %25, %0 : vector<256x128xf32>
    %c0_14 = arith.constant 0 : index
    %c0_15 = arith.constant 0 : index
    %27 = vector.load %arg6[%c0_14, %c0_15] : memref<256x128xf32, #tpu.memory_space<vmem>>, vector<256x128xf32>
    tpu.vector_store %arg6[%c0_14, %c0_15], %26 {strides = array<i32>} : memref<256x128xf32, #tpu.memory_space<vmem>>, vector<256x128xf32>,
    return
  }
  func.func @transform_0(%arg0: i32) -> (i32, i32) {
    %c0_i32 = arith.constant 0 : i32
    %c0_i32_0 = arith.constant 0 : i32
    return %arg0, %c0_i32 : i32, i32
  }
  func.func @transform_1(%arg0: i32) -> (i32, i32) {
    %c0_i32 = arith.constant 0 : i32
    %c0_i32_0 = arith.constant 0 : i32
    %c0_i32_1 = arith.constant 0 : i32
    return %c0_i32, %c0_i32_0 : i32, i32
  }
  func.func @transform_2(%arg0: i32) -> (i32, i32) {
    %c0_i32 = arith.constant 0 : i32
    %c0_i32_0 = arith.constant 0 : i32
    %c0_i32_1 = arith.constant 0 : i32
    return %c0_i32, %c0_i32_0 : i32, i32
  }
  func.func @transform_3(%arg0: i32) -> (i32, i32) {
    %c0_i32 = arith.constant 0 : i32
    %c0_i32_0 = arith.constant 0 : i32
    %c0_i32_1 = arith.constant 0 : i32
    return %c0_i32, %c0_i32_0 : i32, i32
  }
  func.func @transform_4(%arg0: i32) -> (i32, i32) {
    %c0_i32 = arith.constant 0 : i32
    %c0_i32_0 = arith.constant 0 : i32
    %c0_i32_1 = arith.constant 0 : i32
    return %c0_i32, %c0_i32_0 : i32, i32
  }
  func.func @transform_5(%arg0: i32) -> (i32, i32) {
    %c0_i32 = arith.constant 0 : i32
    %c0_i32_0 = arith.constant 0 : i32
    return %arg0, %c0_i32 : i32, i32
  }
}

module attributes {stable_mosaic.version = 11 : i64} {
  func.func @_residual_ff_kernel(%arg0: i32, %arg1: memref<256x128xf32, #tpu.memory_space<vmem>>, %arg2: memref<128x128xbf16, #tpu.memory_space<vmem>>, %arg3: memref<1x128xf32, #tpu.memory_space<vmem>>, %arg4: memref<128x128xbf16, #tpu.memory_space<vmem>>, %arg5: memref<1x128xf32, #tpu.memory_space<vmem>>, %arg6: memref<256x128xf32, #tpu.memory_space<vmem>>) attributes {dimension_semantics = [#tpu.dimension_semantics<parallel>], iteration_bounds = array<i64: 1>, scalar_prefetch = 0 : i64, scratch_operands = 0 : i64, tpu.core_type = #tpu.core_type<tc>, window_params = [{transform_indices = @transform_0, window_bounds = array<i64: 256, 128>}, {pipeline_mode = #tpu.pipeline_mode<synchronous>, transform_indices = @transform_1, window_bounds = array<i64: 128, 128>}, {pipeline_mode = #tpu.pipeline_mode<synchronous>, transform_indices = @transform_2, window_bounds = array<i64: 1, 128>}, {pipeline_mode = #tpu.pipeline_mode<synchronous>, transform_indices = @transform_3, window_bounds = array<i64: 128, 128>}, {pipeline_mode = #tpu.pipeline_mode<synchronous>, transform_indices = @transform_4, window_bounds = array<i64: 1, 128>}, {transform_indices = @transform_5, window_bounds = array<i64: 256, 128>}]} {
    %c0 = arith.constant 0 : index
    %c0_0 = arith.constant 0 : index
    %0 = vector.load %arg1[%c0, %c0_0] : memref<256x128xf32, #tpu.memory_space<vmem>>, vector<256x128xf32>
    %1 = arith.truncf %0 : vector<256x128xf32> to vector<256x128xbf16>
    %c0_1 = arith.constant 0 : index
    %c0_2 = arith.constant 0 : index
    %2 = vector.load %arg2[%c0_1, %c0_2] : memref<128x128xbf16, #tpu.memory_space<vmem>>, vector<128x128xbf16>
    %cst = arith.constant dense<0.000000e+00> : vector<256x128xf32>
    %3 = tpu.matmul %1, %2, %cst {dimension_numbers = #tpu.dot_dimension_numbers<[1], [0], [0], [1], [0, 0, 1, 1], [], []>} : vector<256x128xbf16>, vector<128x128xbf16>, vector<256x128xf32> -> vector<256x128xf32>
    %c0_3 = arith.constant 0 : index
    %c0_4 = arith.constant 0 : index
    %4 = vector.load %arg3[%c0_3, %c0_4] : memref<1x128xf32, #tpu.memory_space<vmem>>, vector<1x128xf32>
    %5 = vector.broadcast %4 : vector<1x128xf32> to vector<256x128xf32>
    %6 = arith.addf %3, %5 : vector<256x128xf32>
    %7 = arith.mulf %6, %6 : vector<256x128xf32>
    %8 = arith.mulf %6, %7 : vector<256x128xf32>
    %cst_5 = arith.constant 4.471500e-02 : f32
    %9 = vector.broadcast %cst_5 : f32 to vector<256x128xf32>
    %10 = arith.mulf %9, %8 : vector<256x128xf32>
    %11 = arith.addf %6, %10 : vector<256x128xf32>
    %cst_6 = arith.constant 0.797884583 : f32
    %12 = vector.broadcast %cst_6 : f32 to vector<256x128xf32>
    %13 = arith.mulf %12, %11 : vector<256x128xf32>
    %14 = math.tanh %13 : vector<256x128xf32>
    %cst_7 = arith.constant 1.000000e+00 : f32
    %15 = vector.broadcast %cst_7 : f32 to vector<256x128xf32>
    %16 = arith.addf %15, %14 : vector<256x128xf32>
    %cst_8 = arith.constant 5.000000e-01 : f32
    %17 = vector.broadcast %cst_8 : f32 to vector<256x128xf32>
    %18 = arith.mulf %17, %16 : vector<256x128xf32>
    %19 = arith.mulf %6, %18 : vector<256x128xf32>
    %20 = arith.truncf %19 : vector<256x128xf32> to vector<256x128xbf16>
    %c0_9 = arith.constant 0 : index
    %c0_10 = arith.constant 0 : index
    %21 = vector.load %arg4[%c0_9, %c0_10] : memref<128x128xbf16, #tpu.memory_space<vmem>>, vector<128x128xbf16>
    %cst_11 = arith.constant dense<0.000000e+00> : vector<256x128xf32>
    %22 = tpu.matmul %20, %21, %cst_11 {dimension_numbers = #tpu.dot_dimension_numbers<[1], [0], [0], [1], [0, 0, 1, 1], [], []>} : vector<256x128xbf16>, vector<128x128xbf16>, vector<256x128xf32> -> vector<256x128xf32>
    %c0_12 = arith.constant 0 : index
    %c0_13 = arith.constant 0 : index
    %23 = vector.load %arg5[%c0_12, %c0_13] : memref<1x128xf32, #tpu.memory_space<vmem>>, vector<1x128xf32>
    %24 = vector.broadcast %23 : vector<1x128xf32> to vector<256x128xf32>
    %25 = arith.addf %22, %24 : vector<256x128xf32>
    %26 = arith.addf %25, %0 : vector<256x128xf32>
    %c0_14 = arith.constant 0 : index
    %c0_15 = arith.constant 0 : index
    %27 = vector.load %arg6[%c0_14, %c0_15] : memref<256x128xf32, #tpu.memory_space<vmem>>, vector<256x128xf32>
    tpu.vector_store %arg6[%c0_14, %c0_15], %26 {strides = array<i32>} : memref<256x128xf32, #tpu.memory_space<vmem>>, vector<256x128xf32>,
    return
  }
  func.func @transform_0(%arg0: i32) -> (i32, i32) {
    %c0_i32 = arith.constant 0 : i32
    %c0_i32_0 = arith.constant 0 : i32
    return %arg0, %c0_i32 : i32, i32
  }
  func.func @transform_1(%arg0: i32) -> (i32, i32) {
    %c0_i32 = arith.constant 0 : i32
    %c0_i32_0 = arith.constant 0 : i32
    %c0_i32_1 = arith.constant 0 : i32
    return %c0_i32, %c0_i32_0 : i32, i32
  }
  func.func @transform_2(%arg0: i32) -> (i32, i32) {
    %c0_i32 = arith.constant 0 : i32
    %c0_i32_0 = arith.constant 0 : i32
    %c0_i32_1 = arith.constant 0 : i32
    return %c0_i32, %c0_i32_0 : i32, i32
  }
  func.func @transform_3(%arg0: i32) -> (i32, i32) {
    %c0_i32 = arith.constant 0 : i32
    %c0_i32_0 = arith.constant 0 : i32
    %c0_i32_1 = arith.constant 0 : i32
    return %c0_i32, %c0_i32_0 : i32, i32
  }
  func.func @transform_4(%arg0: i32) -> (i32, i32) {
    %c0_i32 = arith.constant 0 : i32
    %c0_i32_0 = arith.constant 0 : i32
    %c0_i32_1 = arith.constant 0 : i32
    return %c0_i32, %c0_i32_0 : i32, i32
  }
  func.func @transform_5(%arg0: i32) -> (i32, i32) {
    %c0_i32 = arith.constant 0 : i32
    %c0_i32_0 = arith.constant 0 : i32
    return %arg0, %c0_i32 : i32, i32
  }
}

</mosaic_0001>

<llo_original>
// kernel: _residual_ff_impl.1
$region0: #{_residual_ff_impl.1}
  #allocation0 [shape = 'u32[]', space=smem, size = 0x4, offset = 0x4, fixed_abs, tag = 'smem constant byte address 0x4 - core index']
  #allocation1 [shape = 'u32[72,128]{1,0:T(1,128)}', space=vmem, size = 0x9000, scoped, tag = 'internal scratch']
  %s0 = inlined_call_operand.vmem [shape: f32[256,128], index: 0, kind: input, shape index: {}, may-alias: {0,5}]
  %s1 = inlined_call_operand.vmem [shape: bf16[128,128], index: 1, kind: input, shape index: {}]
  %s2 = inlined_call_operand.vmem [shape: f32[1,128], index: 2, kind: input, shape index: {}]
  %s3 = inlined_call_operand.vmem [shape: bf16[128,128], index: 3, kind: input, shape index: {}]
  %s4 = inlined_call_operand.vmem [shape: f32[1,128], index: 4, kind: input, shape index: {}]
  %s5 = inlined_call_operand.vmem [shape: f32[256,128], index: 5, kind: output, shape index: {}, may-alias: {0,5}]
  %s6 = sld [smem:[#allocation0]]
  $region30: #{_residual_ff_impl.1} parent=0
    _
  %s8 = ssub.s32 1, %s6
  %s9 = scalar_select 0, %s8, %s6
  // Predicated region
  $region2: #{_residual_ff_impl.1} parent=0 // pred_check
    _
  $region3: #{_residual_ff_impl.1} parent=0 // pred_check_branch
    %11 = sbr.rel (0) target = $region5
  $region4: #{_residual_ff_impl.1} parent=0 // pred_region
    _
  $region5: #{_residual_ff_impl.1} parent=0 // pred_fallthru
    _
  // Predicated region
  $region6: #{_residual_ff_impl.1} parent=0 // pred_check
    _
  $region7: #{_residual_ff_impl.1} parent=0 // pred_check_branch
    %13 = sbr.rel (0) target = $region9
  $region8: #{_residual_ff_impl.1} parent=0 // pred_region
    _
  $region9: #{_residual_ff_impl.1} parent=0 // pred_fallthru
    _
  // Predicated region
  $region10: #{_residual_ff_impl.1} parent=0 // pred_check
    _
  $region11: #{_residual_ff_impl.1} parent=0 // pred_check_branch
    %15 = sbr.rel (0) target = $region13
  $region12: #{_residual_ff_impl.1} parent=0 // pred_region
    _
  $region13: #{_residual_ff_impl.1} parent=0 // pred_fallthru
    _
  // Predicated region
  $region14: #{_residual_ff_impl.1} parent=0 // pred_check
    _
  $region15: #{_residual_ff_impl.1} parent=0 // pred_check_branch
    %17 = sbr.rel (0) target = $region17
  $region16: #{_residual_ff_impl.1} parent=0 // pred_region
    _
  $region17: #{_residual_ff_impl.1} parent=0 // pred_fallthru
    _
  // Predicated region
  $region18: #{_residual_ff_impl.1} parent=0 // pred_check
    _
  $region19: #{_residual_ff_impl.1} parent=0 // pred_check_branch
    %19 = sbr.rel (0) target = $region21
  $region20: #{_residual_ff_impl.1} parent=0 // pred_region
    _
  $region21: #{_residual_ff_impl.1} parent=0 // pred_fallthru
    _
  %v20 = vld [vmem:[%s0] sm:$0xff]
  %v21 = vld [vmem:[%s0 + $0x8] sm:$0xff]
  %v22 = vld [vmem:[%s0 + $0x10] sm:$0xff]
  %v23 = vld [vmem:[%s0 + $0x18] sm:$0xff]
  %v24 = vld [vmem:[%s0 + $0x20] sm:$0xff]
  %v25 = vld [vmem:[%s0 + $0x28] sm:$0xff]
  %v26 = vld [vmem:[%s0 + $0x30] sm:$0xff]
  %v27 = vld [vmem:[%s0 + $0x38] sm:$0xff]
  %v28 = vld [vmem:[%s0 + $0x40] sm:$0xff]
  %v29 = vld [vmem:[%s0 + $0x48] sm:$0xff]
  %v30 = vld [vmem:[%s0 + $0x50] sm:$0xff]
  %v31 = vld [vmem:[%s0 + $0x58] sm:$0xff]
  %v32 = vld [vmem:[%s0 + $0x60] sm:$0xff]
  %v33 = vld [vmem:[%s0 + $0x68] sm:$0xff]
  %v34 = vld [vmem:[%s0 + $0x70] sm:$0xff]
  %v35 = vld [vmem:[%s0 + $0x78] sm:$0xff]
  %v36 = vld [vmem:[%s0 + $0x80] sm:$0xff]
  %v37 = vld [vmem:[%s0 + $0x88] sm:$0xff]
  %v38 = vld [vmem:[%s0 + $0x90] sm:$0xff]
  %v39 = vld [vmem:[%s0 + $0x98] sm:$0xff]
  %v40 = vld [vmem:[%s0 + $0xa0] sm:$0xff]
  %v41 = vld [vmem:[%s0 + $0xa8] sm:$0xff]
  %v42 = vld [vmem:[%s0 + $0xb0] sm:$0xff]
  %v43 = vld [vmem:[%s0 + $0xb8] sm:$0xff]
  %v44 = vld [vmem:[%s0 + $0xc0] sm:$0xff]
  %v45 = vld [vmem:[%s0 + $0xc8] sm:$0xff]
  %v46 = vld [vmem:[%s0 + $0xd0] sm:$0xff]
  %v47 = vld [vmem:[%s0 + $0xd8] sm:$0xff]
  %v48 = vld [vmem:[%s0 + $0xe0] sm:$0xff]
  %v49 = vld [vmem:[%s0 + $0xe8] sm:$0xff]
  %v50 = vld [vmem:[%s0 + $0xf0] sm:$0xff]
  %v51 = vld [vmem:[%s0 + $0xf8] sm:$0xff]
  %v52 = vpack.c.bf16 %v21, %v20
  %v53 = vpack.c.bf16 %v23, %v22
  %v54 = vpack.c.bf16 %v25, %v24
  %v55 = vpack.c.bf16 %v27, %v26
  %v56 = vpack.c.bf16 %v29, %v28
  %v57 = vpack.c.bf16 %v31, %v30
  %v58 = vpack.c.bf16 %v33, %v32
  %v59 = vpack.c.bf16 %v35, %v34
  %v60 = vpack.c.bf16 %v37, %v36
  %v61 = vpack.c.bf16 %v39, %v38
  %v62 = vpack.c.bf16 %v41, %v40
  %v63 = vpack.c.bf16 %v43, %v42
  %v64 = vpack.c.bf16 %v45, %v44
  %v65 = vpack.c.bf16 %v47, %v46
  %v66 = vpack.c.bf16 %v49, %v48
  %v67 = vpack.c.bf16 %v51, %v50
  %v68 = vld [vmem:[%s1] sm:$0xf]
  %v69 = vld [vmem:[%s1 + $0x4] sm:$0xf]
  %v70 = vld [vmem:[%s1 + $0x8] sm:$0xf]
  %v71 = vld [vmem:[%s1 + $0xc] sm:$0xf]
  %v72 = vld [vmem:[%s1 + $0x10] sm:$0xf]
  %v73 = vld [vmem:[%s1 + $0x14] sm:$0xf]
  %v74 = vld [vmem:[%s1 + $0x18] sm:$0xf]
  %v75 = vld [vmem:[%s1 + $0x1c] sm:$0xf]
  %v76 = vld [vmem:[%s1 + $0x20] sm:$0xf]
  %v77 = vld [vmem:[%s1 + $0x24] sm:$0xf]
  %v78 = vld [vmem:[%s1 + $0x28] sm:$0xf]
  %v79 = vld [vmem:[%s1 + $0x2c] sm:$0xf]
  %v80 = vld [vmem:[%s1 + $0x30] sm:$0xf]
  %v81 = vld [vmem:[%s1 + $0x34] sm:$0xf]
  %v82 = vld [vmem:[%s1 + $0x38] sm:$0xf]
  %v83 = vld [vmem:[%s1 + $0x3c] sm:$0xf]
  %v84 = vld [vmem:[%s2] sm:$0x1]
  %v86 = vperm.slane %v84, 0
  %v104 = vunpack.c.l.b16 %v68
  %v105 = vunpack.c.l.b16 %v69
  %v106 = vunpack.c.l.b16 %v70
  %v107 = vunpack.c.l.b16 %v71
  %v108 = vunpack.c.l.b16 %v72
  %v109 = vunpack.c.l.b16 %v73
  %v110 = vunpack.c.l.b16 %v74
  %v111 = vunpack.c.l.b16 %v75
  %v112 = vunpack.c.l.b16 %v76
  %v113 = vunpack.c.l.b16 %v77
  %v114 = vunpack.c.l.b16 %v78
  %v115 = vunpack.c.l.b16 %v79
  %v116 = vunpack.c.l.b16 %v80
  %v117 = vunpack.c.l.b16 %v81
  %v118 = vunpack.c.l.b16 %v82
  %v119 = vunpack.c.l.b16 %v83
  %v120 = vpack.c.b16 %v105, %v104
  %v121 = vpack.c.b16 %v107, %v106
  %v122 = vpack.c.b16 %v109, %v108
  %v123 = vpack.c.b16 %v111, %v110
  %v124 = vpack.c.b16 %v113, %v112
  %v125 = vpack.c.b16 %v115, %v114
  %v126 = vpack.c.b16 %v117, %v116
  %v127 = vpack.c.b16 %v119, %v118
  %136 = vmatpush.bf16.msra.mxu0 %v127
  %137 = vmatpush.bf16.msra.mxu0 %v126
  %138 = vmatpush.bf16.msra.mxu0 %v125
  %139 = vmatpush.bf16.msra.mxu0 %v124
  %140 = vmatpush.bf16.msra.mxu0 %v123
  %141 = vmatpush.bf16.msra.mxu0 %v122
  %142 = vmatpush.bf16.msra.mxu0 %v121
  %143 = vmatpush.bf16.msra.mxu0 %v120
  %144 = vmatmul.bf16.gmra.mxu0 %v52
  %v145 = vpop.f32.mrf.mxu0
  %v146 = vadd.f32 %v86, %v145
  %v147 = vpop.f32.mrf.mxu0
  %v148 = vadd.f32 %v86, %v147
  %149 = vmatmul.bf16.gmra.mxu0 %v53
  %v150 = vpop.f32.mrf.mxu0
  %v151 = vadd.f32 %v86, %v150
  %v152 = vpop.f32.mrf.mxu0
  %v153 = vadd.f32 %v86, %v152
  %154 = vmatmul.bf16.gmra.mxu0 %v54
  %v155 = vpop.f32.mrf.mxu0
  %v156 = vadd.f32 %v86, %v155
  %v157 = vpop.f32.mrf.mxu0
  %v158 = vadd.f32 %v86, %v157
  %159 = vmatmul.bf16.gmra.mxu0 %v55
  %v160 = vpop.f32.mrf.mxu0
  %v161 = vadd.f32 %v86, %v160
  %v162 = vpop.f32.mrf.mxu0
  %v163 = vadd.f32 %v86, %v162
  %164 = vmatmul.bf16.gmra.mxu0 %v56
  %v165 = vpop.f32.mrf.mxu0
  %v166 = vadd.f32 %v86, %v165
  %v167 = vpop.f32.mrf.mxu0
  %v168 = vadd.f32 %v86, %v167
  %169 = vmatmul.bf16.gmra.mxu0 %v57
  %v170 = vpop.f32.mrf.mxu0
  %v171 = vadd.f32 %v86, %v170
  %v172 = vpop.f32.mrf.mxu0
  %v173 = vadd.f32 %v86, %v172
  %174 = vmatmul.bf16.gmra.mxu0 %v58
  %v175 = vpop.f32.mrf.mxu0
  %v176 = vadd.f32 %v86, %v175
  %v177 = vpop.f32.mrf.mxu0
  %v178 = vadd.f32 %v86, %v177
  %179 = vmatmul.bf16.gmra.mxu0 %v59
  %v180 = vpop.f32.mrf.mxu0
  %v181 = vadd.f32 %v86, %v180
  %v182 = vpop.f32.mrf.mxu0
  %v183 = vadd.f32 %v86, %v182
  %184 = vmatmul.bf16.gmra.mxu0 %v60
  %v185 = vpop.f32.mrf.mxu0
  %v186 = vadd.f32 %v86, %v185
  %v187 = vpop.f32.mrf.mxu0
  %v188 = vadd.f32 %v86, %v187
  %189 = vmatmul.bf16.gmra.mxu0 %v61
  %v190 = vpop.f32.mrf.mxu0
  %v191 = vadd.f32 %v86, %v190
  %v192 = vpop.f32.mrf.mxu0
  %v193 = vadd.f32 %v86, %v192
  %194 = vmatmul.bf16.gmra.mxu0 %v62
  %v195 = vpop.f32.mrf.mxu0
  %v196 = vadd.f32 %v86, %v195
  %v197 = vpop.f32.mrf.mxu0
  %v198 = vadd.f32 %v86, %v197
  %199 = vmatmul.bf16.gmra.mxu0 %v63
  %v200 = vpop.f32.mrf.mxu0
  %v201 = vadd.f32 %v86, %v200
  %v202 = vpop.f32.mrf.mxu0
  %v203 = vadd.f32 %v86, %v202
  %204 = vmatmul.bf16.gmra.mxu0 %v64
  %v205 = vpop.f32.mrf.mxu0
  %v206 = vadd.f32 %v86, %v205
  %v207 = vpop.f32.mrf.mxu0
  %v208 = vadd.f32 %v86, %v207
  %209 = vmatmul.bf16.gmra.mxu0 %v65
  %v210 = vpop.f32.mrf.mxu0
  %v211 = vadd.f32 %v86, %v210
  %v212 = vpop.f32.mrf.mxu0
  %v213 = vadd.f32 %v86, %v212
  %214 = vmatmul.bf16.gmra.mxu0 %v66
  %v215 = vpop.f32.mrf.mxu0
  %v216 = vadd.f32 %v86, %v215
  %v217 = vpop.f32.mrf.mxu0
  %v218 = vadd.f32 %v86, %v217
  %219 = vmatmul.bf16.gmra.mxu0 %v67
  %v220 = vpop.f32.mrf.mxu0
  %v221 = vadd.f32 %v86, %v220
  %v222 = vpop.f32.mrf.mxu0
  %v223 = vadd.f32 %v86, %v222
  %224 = vdwg.mxu0
  %v225 = vmul.f32 %v146, %v146
  %v226 = vmul.f32 %v148, %v148
  %v227 = vmul.f32 %v151, %v151
  %v228 = vmul.f32 %v153, %v153
  %v229 = vmul.f32 %v156, %v156
  %v230 = vmul.f32 %v158, %v158
  %v231 = vmul.f32 %v161, %v161
  %v232 = vmul.f32 %v163, %v163
  %v233 = vmul.f32 %v166, %v166
  %v234 = vmul.f32 %v168, %v168
  %v235 = vmul.f32 %v171, %v171
  %v236 = vmul.f32 %v173, %v173
  %v237 = vmul.f32 %v176, %v176
  %v238 = vmul.f32 %v178, %v178
  %v239 = vmul.f32 %v181, %v181
  %v240 = vmul.f32 %v183, %v183
  %v241 = vmul.f32 %v186, %v186
  %v242 = vmul.f32 %v188, %v188
  %v243 = vmul.f32 %v191, %v191
  %v244 = vmul.f32 %v193, %v193
  %v245 = vmul.f32 %v196, %v196
  %v246 = vmul.f32 %v198, %v198
  %v247 = vmul.f32 %v201, %v201
  %v248 = vmul.f32 %v203, %v203
  %v249 = vmul.f32 %v206, %v206
  %v250 = vmul.f32 %v208, %v208
  %v251 = vmul.f32 %v211, %v211
  %v252 = vmul.f32 %v213, %v213
  %v253 = vmul.f32 %v216, %v216
  %v254 = vmul.f32 %v218, %v218
  %v255 = vmul.f32 %v221, %v221
  %v256 = vmul.f32 %v223, %v223
  %v257 = vmul.f32 %v146, %v225
  %v258 = vmul.f32 %v148, %v226
  %v259 = vmul.f32 %v151, %v227
  %v260 = vmul.f32 %v153, %v228
  %v261 = vmul.f32 %v156, %v229
  %v262 = vmul.f32 %v158, %v230
  %v263 = vmul.f32 %v161, %v231
  %v264 = vmul.f32 %v163, %v232
  %v265 = vmul.f32 %v166, %v233
  %v266 = vmul.f32 %v168, %v234
  %v267 = vmul.f32 %v171, %v235
  %v268 = vmul.f32 %v173, %v236
  %v269 = vmul.f32 %v176, %v237
  %v270 = vmul.f32 %v178, %v238
  %v271 = vmul.f32 %v181, %v239
  %v272 = vmul.f32 %v183, %v240
  %v273 = vmul.f32 %v186, %v241
  %v274 = vmul.f32 %v188, %v242
  %v275 = vmul.f32 %v191, %v243
  %v276 = vmul.f32 %v193, %v244
  %v277 = vmul.f32 %v196, %v245
  %v278 = vmul.f32 %v198, %v246
  %v279 = vmul.f32 %v201, %v247
  %v280 = vmul.f32 %v203, %v248
  %v281 = vmul.f32 %v206, %v249
  %v282 = vmul.f32 %v208, %v250
  %v283 = vmul.f32 %v211, %v251
  %v284 = vmul.f32 %v213, %v252
  %v285 = vmul.f32 %v216, %v253
  %v286 = vmul.f32 %v218, %v254
  %v287 = vmul.f32 %v221, %v255
  %v288 = vmul.f32 %v223, %v256
  %v289 = vmul.f32 %v257, 0.044715
  %v290 = vmul.f32 %v258, 0.044715
  %v291 = vmul.f32 %v259, 0.044715
  %v292 = vmul.f32 %v260, 0.044715
  %v293 = vmul.f32 %v261, 0.044715
  %v294 = vmul.f32 %v262, 0.044715
  %v295 = vmul.f32 %v263, 0.044715
  %v296 = vmul.f32 %v264, 0.044715
  %v297 = vmul.f32 %v265, 0.044715
  %v298 = vmul.f32 %v266, 0.044715
  %v299 = vmul.f32 %v267, 0.044715
  %v300 = vmul.f32 %v268, 0.044715
  %v301 = vmul.f32 %v269, 0.044715
  %v302 = vmul.f32 %v270, 0.044715
  %v303 = vmul.f32 %v271, 0.044715
  %v304 = vmul.f32 %v272, 0.044715
  %v305 = vmul.f32 %v273, 0.044715
  %v306 = vmul.f32 %v274, 0.044715
  %v307 = vmul.f32 %v275, 0.044715
  %v308 = vmul.f32 %v276, 0.044715
  %v309 = vmul.f32 %v277, 0.044715
  %v310 = vmul.f32 %v278, 0.044715
  %v311 = vmul.f32 %v279, 0.044715
  %v312 = vmul.f32 %v280, 0.044715
  %v313 = vmul.f32 %v281, 0.044715
  %v314 = vmul.f32 %v282, 0.044715
  %v315 = vmul.f32 %v283, 0.044715
  %v316 = vmul.f32 %v284, 0.044715
  %v317 = vmul.f32 %v285, 0.044715
  %v318 = vmul.f32 %v286, 0.044715
  %v319 = vmul.f32 %v287, 0.044715
  %v320 = vmul.f32 %v288, 0.044715
  %v321 = vadd.f32 %v146, %v289
  %v322 = vadd.f32 %v148, %v290
  %v323 = vadd.f32 %v151, %v291
  %v324 = vadd.f32 %v153, %v292
  %v325 = vadd.f32 %v156, %v293
  %v326 = vadd.f32 %v158, %v294
  %v327 = vadd.f32 %v161, %v295
  %v328 = vadd.f32 %v163, %v296
  %v329 = vadd.f32 %v166, %v297
  %v330 = vadd.f32 %v168, %v298
  %v331 = vadd.f32 %v171, %v299
  %v332 = vadd.f32 %v173, %v300
  %v333 = vadd.f32 %v176, %v301
  %v334 = vadd.f32 %v178, %v302
  %v335 = vadd.f32 %v181, %v303
  %v336 = vadd.f32 %v183, %v304
  %v337 = vadd.f32 %v186, %v305
  %v338 = vadd.f32 %v188, %v306
  %v339 = vadd.f32 %v191, %v307
  %v340 = vadd.f32 %v193, %v308
  %v341 = vadd.f32 %v196, %v309
  %v342 = vadd.f32 %v198, %v310
  %v343 = vadd.f32 %v201, %v311
  %v344 = vadd.f32 %v203, %v312
  %v345 = vadd.f32 %v206, %v313
  %v346 = vadd.f32 %v208, %v314
  %v347 = vadd.f32 %v211, %v315
  %v348 = vadd.f32 %v213, %v316
  %v349 = vadd.f32 %v216, %v317
  %v350 = vadd.f32 %v218, %v318
  %v351 = vadd.f32 %v221, %v319
  %v352 = vadd.f32 %v223, %v320
  %v353 = vmul.f32 %v321, 0.7978846
  %v354 = vmul.f32 %v322, 0.7978846
  %v355 = vmul.f32 %v323, 0.7978846
  %v356 = vmul.f32 %v324, 0.7978846
  %v357 = vmul.f32 %v325, 0.7978846
  %v358 = vmul.f32 %v326, 0.7978846
  %v359 = vmul.f32 %v327, 0.7978846
  %v360 = vmul.f32 %v328, 0.7978846
  %v361 = vmul.f32 %v329, 0.7978846
  %v362 = vmul.f32 %v330, 0.7978846
  %v363 = vmul.f32 %v331, 0.7978846
  %v364 = vmul.f32 %v332, 0.7978846
  %v365 = vmul.f32 %v333, 0.7978846
  %v366 = vmul.f32 %v334, 0.7978846
  %v367 = vmul.f32 %v335, 0.7978846
  %v368 = vmul.f32 %v336, 0.7978846
  %v369 = vmul.f32 %v337, 0.7978846
  %v370 = vmul.f32 %v338, 0.7978846
  %v371 = vmul.f32 %v339, 0.7978846
  %v372 = vmul.f32 %v340, 0.7978846
  %v373 = vmul.f32 %v341, 0.7978846
  %v374 = vmul.f32 %v342, 0.7978846
  %v375 = vmul.f32 %v343, 0.7978846
  %v376 = vmul.f32 %v344, 0.7978846
  %v377 = vmul.f32 %v345, 0.7978846
  %v378 = vmul.f32 %v346, 0.7978846
  %v379 = vmul.f32 %v347, 0.7978846
  %v380 = vmul.f32 %v348, 0.7978846
  %v381 = vmul.f32 %v349, 0.7978846
  %v382 = vmul.f32 %v350, 0.7978846
  %v383 = vmul.f32 %v351, 0.7978846
  %v384 = vmul.f32 %v352, 0.7978846
  %v385 = vtanh.pop %v353
  %v386 = vtanh.pop %v354
  %v387 = vtanh.pop %v355
  %v388 = vtanh.pop %v356
  %v389 = vtanh.pop %v357
  %v390 = vtanh.pop %v358
  %v391 = vtanh.pop %v359
  %v392 = vtanh.pop %v360
  %v393 = vtanh.pop %v361
  %v394 = vtanh.pop %v362
  %v395 = vtanh.pop %v363
  %v396 = vtanh.pop %v364
  %v397 = vtanh.pop %v365
  %v398 = vtanh.pop %v366
  %v399 = vtanh.pop %v367
  %v400 = vtanh.pop %v368
  %v401 = vtanh.pop %v369
  %v402 = vtanh.pop %v370
  %v403 = vtanh.pop %v371
  %v404 = vtanh.pop %v372
  %v405 = vtanh.pop %v373
  %v406 = vtanh.pop %v374
  %v407 = vtanh.pop %v375
  %v408 = vtanh.pop %v376
  %v409 = vtanh.pop %v377
  %v410 = vtanh.pop %v378
  %v411 = vtanh.pop %v379
  %v412 = vtanh.pop %v380
  %v413 = vtanh.pop %v381
  %v414 = vtanh.pop %v382
  %v415 = vtanh.pop %v383
  %v416 = vtanh.pop %v384
  %v417 = vadd.f32 %v385, 1.0
  %v418 = vadd.f32 %v386, 1.0
  %v419 = vadd.f32 %v387, 1.0
  %v420 = vadd.f32 %v388, 1.0
  %v421 = vadd.f32 %v389, 1.0
  %v422 = vadd.f32 %v390, 1.0
  %v423 = vadd.f32 %v391, 1.0
  %v424 = vadd.f32 %v392, 1.0
  %v425 = vadd.f32 %v393, 1.0
  %v426 = vadd.f32 %v394, 1.0
  %v427 = vadd.f32 %v395, 1.0
  %v428 = vadd.f32 %v396, 1.0
  %v429 = vadd.f32 %v397, 1.0
  %v430 = vadd.f32 %v398, 1.0
  %v431 = vadd.f32 %v399, 1.0
  %v432 = vadd.f32 %v400, 1.0
  %v433 = vadd.f32 %v401, 1.0
  %v434 = vadd.f32 %v402, 1.0
  %v435 = vadd.f32 %v403, 1.0
  %v436 = vadd.f32 %v404, 1.0
  %v437 = vadd.f32 %v405, 1.0
  %v438 = vadd.f32 %v406, 1.0
  %v439 = vadd.f32 %v407, 1.0
  %v440 = vadd.f32 %v408, 1.0
  %v441 = vadd.f32 %v409, 1.0
  %v442 = vadd.f32 %v410, 1.0
  %v443 = vadd.f32 %v411, 1.0
  %v444 = vadd.f32 %v412, 1.0
  %v445 = vadd.f32 %v413, 1.0
  %v446 = vadd.f32 %v414, 1.0
  %v447 = vadd.f32 %v415, 1.0
  %v448 = vadd.f32 %v416, 1.0
  %v449 = vmul.f32 %v417, 0.5
  %v450 = vmul.f32 %v418, 0.5
  %v451 = vmul.f32 %v419, 0.5
  %v452 = vmul.f32 %v420, 0.5
  %v453 = vmul.f32 %v421, 0.5
  %v454 = vmul.f32 %v422, 0.5
  %v455 = vmul.f32 %v423, 0.5
  %v456 = vmul.f32 %v424, 0.5
  %v457 = vmul.f32 %v425, 0.5
  %v458 = vmul.f32 %v426, 0.5
  %v459 = vmul.f32 %v427, 0.5
  %v460 = vmul.f32 %v428, 0.5
  %v461 = vmul.f32 %v429, 0.5
  %v462 = vmul.f32 %v430, 0.5
  %v463 = vmul.f32 %v431, 0.5
  %v464 = vmul.f32 %v432, 0.5
  %v465 = vmul.f32 %v433, 0.5
  %v466 = vmul.f32 %v434, 0.5
  %v467 = vmul.f32 %v435, 0.5
  %v468 = vmul.f32 %v436, 0.5
  %v469 = vmul.f32 %v437, 0.5
  %v470 = vmul.f32 %v438, 0.5
  %v471 = vmul.f32 %v439, 0.5
  %v472 = vmul.f32 %v440, 0.5
  %v473 = vmul.f32 %v441, 0.5
  %v474 = vmul.f32 %v442, 0.5
  %v475 = vmul.f32 %v443, 0.5
  %v476 = vmul.f32 %v444, 0.5
  %v477 = vmul.f32 %v445, 0.5
  %v478 = vmul.f32 %v446, 0.5
  %v479 = vmul.f32 %v447, 0.5
  %v480 = vmul.f32 %v448, 0.5
  %v481 = vmul.f32 %v146, %v449
  %v482 = vmul.f32 %v148, %v450
  %v483 = vmul.f32 %v151, %v451
  %v484 = vmul.f32 %v153, %v452
  %v485 = vmul.f32 %v156, %v453
  %v486 = vmul.f32 %v158, %v454
  %v487 = vmul.f32 %v161, %v455
  %v488 = vmul.f32 %v163, %v456
  %v489 = vmul.f32 %v166, %v457
  %v490 = vmul.f32 %v168, %v458
  %v491 = vmul.f32 %v171, %v459
  %v492 = vmul.f32 %v173, %v460
  %v493 = vmul.f32 %v176, %v461
  %v494 = vmul.f32 %v178, %v462
  %v495 = vmul.f32 %v181, %v463
  %v496 = vmul.f32 %v183, %v464
  %v497 = vmul.f32 %v186, %v465
  %v498 = vmul.f32 %v188, %v466
  %v499 = vmul.f32 %v191, %v467
  %v500 = vmul.f32 %v193, %v468
  %v501 = vmul.f32 %v196, %v469
  %v502 = vmul.f32 %v198, %v470
  %v503 = vmul.f32 %v201, %v471
  %v504 = vmul.f32 %v203, %v472
  %v505 = vmul.f32 %v206, %v473
  %v506 = vmul.f32 %v208, %v474
  %v507 = vmul.f32 %v211, %v475
  %v508 = vmul.f32 %v213, %v476
  %v509 = vmul.f32 %v216, %v477
  %v510 = vmul.f32 %v218, %v478
  %v511 = vmul.f32 %v221, %v479
  %v512 = vmul.f32 %v223, %v480
  %v513 = vpack.c.bf16 %v482, %v481
  %v514 = vpack.c.bf16 %v484, %v483
  %v515 = vpack.c.bf16 %v486, %v485
  %v516 = vpack.c.bf16 %v488, %v487
  %v517 = vpack.c.bf16 %v490, %v489
  %v518 = vpack.c.bf16 %v492, %v491
  %v519 = vpack.c.bf16 %v494, %v493
  %v520 = vpack.c.bf16 %v496, %v495
  %v521 = vpack.c.bf16 %v498, %v497
  %v522 = vpack.c.bf16 %v500, %v499
  %v523 = vpack.c.bf16 %v502, %v501
  %v524 = vpack.c.bf16 %v504, %v503
  %v525 = vpack.c.bf16 %v506, %v505
  %v526 = vpack.c.bf16 %v508, %v507
  %v527 = vpack.c.bf16 %v510, %v509
  %v528 = vpack.c.bf16 %v512, %v511
  %v529 = vld [vmem:[%s3] sm:$0xf]
  %v530 = vld [vmem:[%s3 + $0x4] sm:$0xf]
  %v531 = vld [vmem:[%s3 + $0x8] sm:$0xf]
  %v532 = vld [vmem:[%s3 + $0xc] sm:$0xf]
  %v533 = vld [vmem:[%s3 + $0x10] sm:$0xf]
  %v534 = vld [vmem:[%s3 + $0x14] sm:$0xf]
  %v535 = vld [vmem:[%s3 + $0x18] sm:$0xf]
  %v536 = vld [vmem:[%s3 + $0x1c] sm:$0xf]
  %v537 = vld [vmem:[%s3 + $0x20] sm:$0xf]
  %v538 = vld [vmem:[%s3 + $0x24] sm:$0xf]
  %v539 = vld [vmem:[%s3 + $0x28] sm:$0xf]
  %v540 = vld [vmem:[%s3 + $0x2c] sm:$0xf]
  %v541 = vld [vmem:[%s3 + $0x30] sm:$0xf]
  %v542 = vld [vmem:[%s3 + $0x34] sm:$0xf]
  %v543 = vld [vmem:[%s3 + $0x38] sm:$0xf]
  %v544 = vld [vmem:[%s3 + $0x3c] sm:$0xf]
  %v545 = vld [vmem:[%s4] sm:$0x1]
  %v547 = vperm.slane %v545, 0
  %v565 = vunpack.c.l.b16 %v529
  %v566 = vunpack.c.l.b16 %v530
  %v567 = vunpack.c.l.b16 %v531
  %v568 = vunpack.c.l.b16 %v532
  %v569 = vunpack.c.l.b16 %v533
  %v570 = vunpack.c.l.b16 %v534
  %v571 = vunpack.c.l.b16 %v535
  %v572 = vunpack.c.l.b16 %v536
  %v573 = vunpack.c.l.b16 %v537
  %v574 = vunpack.c.l.b16 %v538
  %v575 = vunpack.c.l.b16 %v539
  %v576 = vunpack.c.l.b16 %v540
  %v577 = vunpack.c.l.b16 %v541
  %v578 = vunpack.c.l.b16 %v542
  %v579 = vunpack.c.l.b16 %v543
  %v580 = vunpack.c.l.b16 %v544
  %v581 = vpack.c.b16 %v566, %v565
  %v582 = vpack.c.b16 %v568, %v567
  %v583 = vpack.c.b16 %v570, %v569
  %v584 = vpack.c.b16 %v572, %v571
  %v585 = vpack.c.b16 %v574, %v573
  %v586 = vpack.c.b16 %v576, %v575
  %v587 = vpack.c.b16 %v578, %v577
  %v588 = vpack.c.b16 %v580, %v579
  %597 = vmatpush.bf16.msra.mxu0 %v588
  %598 = vmatpush.bf16.msra.mxu0 %v587
  %599 = vmatpush.bf16.msra.mxu0 %v586
  %600 = vmatpush.bf16.msra.mxu0 %v585
  %601 = vmatpush.bf16.msra.mxu0 %v584
  %602 = vmatpush.bf16.msra.mxu0 %v583
  %603 = vmatpush.bf16.msra.mxu0 %v582
  %604 = vmatpush.bf16.msra.mxu0 %v581
  %605 = vmatmul.bf16.gmra.mxu0 %v513
  %v606 = vpop.f32.mrf.mxu0
  %v607 = vadd.f32 %v547, %v606
  %v608 = vpop.f32.mrf.mxu0
  %v609 = vadd.f32 %v547, %v608
  %610 = vmatmul.bf16.gmra.mxu0 %v514
  %v611 = vpop.f32.mrf.mxu0
  %v612 = vadd.f32 %v547, %v611
  %v613 = vpop.f32.mrf.mxu0
  %v614 = vadd.f32 %v547, %v613
  %615 = vmatmul.bf16.gmra.mxu0 %v515
  %v616 = vpop.f32.mrf.mxu0
  %v617 = vadd.f32 %v547, %v616
  %v618 = vpop.f32.mrf.mxu0
  %v619 = vadd.f32 %v547, %v618
  %620 = vmatmul.bf16.gmra.mxu0 %v516
  %v621 = vpop.f32.mrf.mxu0
  %v622 = vadd.f32 %v547, %v621
  %v623 = vpop.f32.mrf.mxu0
  %v624 = vadd.f32 %v547, %v623
  %625 = vmatmul.bf16.gmra.mxu0 %v517
  %v626 = vpop.f32.mrf.mxu0
  %v627 = vadd.f32 %v547, %v626
  %v628 = vpop.f32.mrf.mxu0
  %v629 = vadd.f32 %v547, %v628
  %630 = vmatmul.bf16.gmra.mxu0 %v518
  %v631 = vpop.f32.mrf.mxu0
  %v632 = vadd.f32 %v547, %v631
  %v633 = vpop.f32.mrf.mxu0
  %v634 = vadd.f32 %v547, %v633
  %635 = vmatmul.bf16.gmra.mxu0 %v519
  %v636 = vpop.f32.mrf.mxu0
  %v637 = vadd.f32 %v547, %v636
  %v638 = vpop.f32.mrf.mxu0
  %v639 = vadd.f32 %v547, %v638
  %640 = vmatmul.bf16.gmra.mxu0 %v520
  %v641 = vpop.f32.mrf.mxu0
  %v642 = vadd.f32 %v547, %v641
  %v643 = vpop.f32.mrf.mxu0
  %v644 = vadd.f32 %v547, %v643
  %645 = vmatmul.bf16.gmra.mxu0 %v521
  %v646 = vpop.f32.mrf.mxu0
  %v647 = vadd.f32 %v547, %v646
  %v648 = vpop.f32.mrf.mxu0
  %v649 = vadd.f32 %v547, %v648
  %650 = vmatmul.bf16.gmra.mxu0 %v522
  %v651 = vpop.f32.mrf.mxu0
  %v652 = vadd.f32 %v547, %v651
  %v653 = vpop.f32.mrf.mxu0
  %v654 = vadd.f32 %v547, %v653
  %655 = vmatmul.bf16.gmra.mxu0 %v523
  %v656 = vpop.f32.mrf.mxu0
  %v657 = vadd.f32 %v547, %v656
  %v658 = vpop.f32.mrf.mxu0
  %v659 = vadd.f32 %v547, %v658
  %660 = vmatmul.bf16.gmra.mxu0 %v524
  %v661 = vpop.f32.mrf.mxu0
  %v662 = vadd.f32 %v547, %v661
  %v663 = vpop.f32.mrf.mxu0
  %v664 = vadd.f32 %v547, %v663
  %665 = vmatmul.bf16.gmra.mxu0 %v525
  %v666 = vpop.f32.mrf.mxu0
  %v667 = vadd.f32 %v547, %v666
  %v668 = vpop.f32.mrf.mxu0
  %v669 = vadd.f32 %v547, %v668
  %670 = vmatmul.bf16.gmra.mxu0 %v526
  %v671 = vpop.f32.mrf.mxu0
  %v672 = vadd.f32 %v547, %v671
  %v673 = vpop.f32.mrf.mxu0
  %v674 = vadd.f32 %v547, %v673
  %675 = vmatmul.bf16.gmra.mxu0 %v527
  %v676 = vpop.f32.mrf.mxu0
  %v677 = vadd.f32 %v547, %v676
  %v678 = vpop.f32.mrf.mxu0
  %v679 = vadd.f32 %v547, %v678
  %680 = vmatmul.bf16.gmra.mxu0 %v528
  %v681 = vpop.f32.mrf.mxu0
  %v682 = vadd.f32 %v547, %v681
  %v683 = vpop.f32.mrf.mxu0
  %v684 = vadd.f32 %v547, %v683
  %685 = vdwg.mxu0
  %v686 = vadd.f32 %v607, %v20
  %v687 = vadd.f32 %v609, %v21
  %v688 = vadd.f32 %v612, %v22
  %v689 = vadd.f32 %v614, %v23
  %v690 = vadd.f32 %v617, %v24
  %v691 = vadd.f32 %v619, %v25
  %v692 = vadd.f32 %v622, %v26
  %v693 = vadd.f32 %v624, %v27
  %v694 = vadd.f32 %v627, %v28
  %v695 = vadd.f32 %v629, %v29
  %v696 = vadd.f32 %v632, %v30
  %v697 = vadd.f32 %v634, %v31
  %v698 = vadd.f32 %v637, %v32
  %v699 = vadd.f32 %v639, %v33
  %v700 = vadd.f32 %v642, %v34
  %v701 = vadd.f32 %v644, %v35
  %v702 = vadd.f32 %v647, %v36
  %v703 = vadd.f32 %v649, %v37
  %v704 = vadd.f32 %v652, %v38
  %v705 = vadd.f32 %v654, %v39
  %v706 = vadd.f32 %v657, %v40
  %v707 = vadd.f32 %v659, %v41
  %v708 = vadd.f32 %v662, %v42
  %v709 = vadd.f32 %v664, %v43
  %v710 = vadd.f32 %v667, %v44
  %v711 = vadd.f32 %v669, %v45
  %v712 = vadd.f32 %v672, %v46
  %v713 = vadd.f32 %v674, %v47
  %v714 = vadd.f32 %v677, %v48
  %v715 = vadd.f32 %v679, %v49
  %v716 = vadd.f32 %v682, %v50
  %v717 = vadd.f32 %v684, %v51
  %718 = vst [vmem:[%s5] sm:$0xff] %v686
  %719 = vst [vmem:[%s5 + $0x8] sm:$0xff] %v687
  %720 = vst [vmem:[%s5 + $0x10] sm:$0xff] %v688
  %721 = vst [vmem:[%s5 + $0x18] sm:$0xff] %v689
  %722 = vst [vmem:[%s5 + $0x20] sm:$0xff] %v690
  %723 = vst [vmem:[%s5 + $0x28] sm:$0xff] %v691
  %724 = vst [vmem:[%s5 + $0x30] sm:$0xff] %v692
  %725 = vst [vmem:[%s5 + $0x38] sm:$0xff] %v693
  %726 = vst [vmem:[%s5 + $0x40] sm:$0xff] %v694
  %727 = vst [vmem:[%s5 + $0x48] sm:$0xff] %v695
  %728 = vst [vmem:[%s5 + $0x50] sm:$0xff] %v696
  %729 = vst [vmem:[%s5 + $0x58] sm:$0xff] %v697
  %730 = vst [vmem:[%s5 + $0x60] sm:$0xff] %v698
  %731 = vst [vmem:[%s5 + $0x68] sm:$0xff] %v699
  %732 = vst [vmem:[%s5 + $0x70] sm:$0xff] %v700
  %733 = vst [vmem:[%s5 + $0x78] sm:$0xff] %v701
  %734 = vst [vmem:[%s5 + $0x80] sm:$0xff] %v702
  %735 = vst [vmem:[%s5 + $0x88] sm:$0xff] %v703
  %736 = vst [vmem:[%s5 + $0x90] sm:$0xff] %v704
  %737 = vst [vmem:[%s5 + $0x98] sm:$0xff] %v705
  %738 = vst [vmem:[%s5 + $0xa0] sm:$0xff] %v706
  %739 = vst [vmem:[%s5 + $0xa8] sm:$0xff] %v707
  %740 = vst [vmem:[%s5 + $0xb0] sm:$0xff] %v708
  %741 = vst [vmem:[%s5 + $0xb8] sm:$0xff] %v709
  %742 = vst [vmem:[%s5 + $0xc0] sm:$0xff] %v710
  %743 = vst [vmem:[%s5 + $0xc8] sm:$0xff] %v711
  %744 = vst [vmem:[%s5 + $0xd0] sm:$0xff] %v712
  %745 = vst [vmem:[%s5 + $0xd8] sm:$0xff] %v713
  %746 = vst [vmem:[%s5 + $0xe0] sm:$0xff] %v714
  %747 = vst [vmem:[%s5 + $0xe8] sm:$0xff] %v715
  %748 = vst [vmem:[%s5 + $0xf0] sm:$0xff] %v716
  %749 = vst [vmem:[%s5 + $0xf8] sm:$0xff] %v717
  // Predicated region
  $region22: #{_residual_ff_impl.1} parent=0 // pred_check
    _
  $region23: #{_residual_ff_impl.1} parent=0 // pred_check_branch
    %751 = sbr.rel (0) target = $region25
  $region24: #{_residual_ff_impl.1} parent=0 // pred_region
    _
  $region25: #{_residual_ff_impl.1} parent=0 // pred_fallthru
    _
  // Predicated region
  $region26: #{_residual_ff_impl.1} parent=0 // pred_check
    _
  $region27: #{_residual_ff_impl.1} parent=0 // pred_check_branch
    %753 = sbr.rel (0) target = $region29
  $region28: #{_residual_ff_impl.1} parent=0 // pred_region
    _
  $region29: #{_residual_ff_impl.1} parent=0 // pred_fallthru
    _

// kernel: _residual_ff_impl.1
$region0: #{_residual_ff_impl.1}
  #allocation0 [shape = 'u32[]', space=smem, size = 0x4, offset = 0x4, fixed_abs, tag = 'smem constant byte address 0x4 - core index']
  #allocation1 [shape = 'u32[72,128]{1,0:T(1,128)}', space=vmem, size = 0x9000, scoped, tag = 'internal scratch']
  %s0 = inlined_call_operand.vmem [shape: f32[256,128], index: 0, kind: input, shape index: {}, may-alias: {0,5}]
  %s1 = inlined_call_operand.vmem [shape: bf16[128,128], index: 1, kind: input, shape index: {}]
  %s2 = inlined_call_operand.vmem [shape: f32[1,128], index: 2, kind: input, shape index: {}]
  %s3 = inlined_call_operand.vmem [shape: bf16[128,128], index: 3, kind: input, shape index: {}]
  %s4 = inlined_call_operand.vmem [shape: f32[1,128], index: 4, kind: input, shape index: {}]
  %s5 = inlined_call_operand.vmem [shape: f32[256,128], index: 5, kind: output, shape index: {}, may-alias: {0,5}]
  %s6 = sld [smem:[#allocation0]]
  $region30: #{_residual_ff_impl.1} parent=0
    _
  %s8 = ssub.s32 1, %s6
  %s9 = scalar_select 0, %s8, %s6
  // Predicated region
  $region2: #{_residual_ff_impl.1} parent=0 // pred_check
    _
  $region3: #{_residual_ff_impl.1} parent=0 // pred_check_branch
    %11 = sbr.rel (0) target = $region5
  $region4: #{_residual_ff_impl.1} parent=0 // pred_region
    _
  $region5: #{_residual_ff_impl.1} parent=0 // pred_fallthru
    _
  // Predicated region
  $region6: #{_residual_ff_impl.1} parent=0 // pred_check
    _
  $region7: #{_residual_ff_impl.1} parent=0 // pred_check_branch
    %13 = sbr.rel (0) target = $region9
  $region8: #{_residual_ff_impl.1} parent=0 // pred_region
    _
  $region9: #{_residual_ff_impl.1} parent=0 // pred_fallthru
    _
  // Predicated region
  $region10: #{_residual_ff_impl.1} parent=0 // pred_check
    _
  $region11: #{_residual_ff_impl.1} parent=0 // pred_check_branch
    %15 = sbr.rel (0) target = $region13
  $region12: #{_residual_ff_impl.1} parent=0 // pred_region
    _
  $region13: #{_residual_ff_impl.1} parent=0 // pred_fallthru
    _
  // Predicated region
  $region14: #{_residual_ff_impl.1} parent=0 // pred_check
    _
  $region15: #{_residual_ff_impl.1} parent=0 // pred_check_branch
    %17 = sbr.rel (0) target = $region17
  $region16: #{_residual_ff_impl.1} parent=0 // pred_region
    _
  $region17: #{_residual_ff_impl.1} parent=0 // pred_fallthru
    _
  // Predicated region
  $region18: #{_residual_ff_impl.1} parent=0 // pred_check
    _
  $region19: #{_residual_ff_impl.1} parent=0 // pred_check_branch
    %19 = sbr.rel (0) target = $region21
  $region20: #{_residual_ff_impl.1} parent=0 // pred_region
    _
  $region21: #{_residual_ff_impl.1} parent=0 // pred_fallthru
    _
  %v20 = vld [vmem:[%s0] sm:$0xff]
  %v21 = vld [vmem:[%s0 + $0x8] sm:$0xff]
  %v22 = vld [vmem:[%s0 + $0x10] sm:$0xff]
  %v23 = vld [vmem:[%s0 + $0x18] sm:$0xff]
  %v24 = vld [vmem:[%s0 + $0x20] sm:$0xff]
  %v25 = vld [vmem:[%s0 + $0x28] sm:$0xff]
  %v26 = vld [vmem:[%s0 + $0x30] sm:$0xff]
  %v27 = vld [vmem:[%s0 + $0x38] sm:$0xff]
  %v28 = vld [vmem:[%s0 + $0x40] sm:$0xff]
  %v29 = vld [vmem:[%s0 + $0x48] sm:$0xff]
  %v30 = vld [vmem:[%s0 + $0x50] sm:$0xff]
  %v31 = vld [vmem:[%s0 + $0x58] sm:$0xff]
  %v32 = vld [vmem:[%s0 + $0x60] sm:$0xff]
  %v33 = vld [vmem:[%s0 + $0x68] sm:$0xff]
  %v34 = vld [vmem:[%s0 + $0x70] sm:$0xff]
  %v35 = vld [vmem:[%s0 + $0x78] sm:$0xff]
  %v36 = vld [vmem:[%s0 + $0x80] sm:$0xff]
  %v37 = vld [vmem:[%s0 + $0x88] sm:$0xff]
  %v38 = vld [vmem:[%s0 + $0x90] sm:$0xff]
  %v39 = vld [vmem:[%s0 + $0x98] sm:$0xff]
  %v40 = vld [vmem:[%s0 + $0xa0] sm:$0xff]
  %v41 = vld [vmem:[%s0 + $0xa8] sm:$0xff]
  %v42 = vld [vmem:[%s0 + $0xb0] sm:$0xff]
  %v43 = vld [vmem:[%s0 + $0xb8] sm:$0xff]
  %v44 = vld [vmem:[%s0 + $0xc0] sm:$0xff]
  %v45 = vld [vmem:[%s0 + $0xc8] sm:$0xff]
  %v46 = vld [vmem:[%s0 + $0xd0] sm:$0xff]
  %v47 = vld [vmem:[%s0 + $0xd8] sm:$0xff]
  %v48 = vld [vmem:[%s0 + $0xe0] sm:$0xff]
  %v49 = vld [vmem:[%s0 + $0xe8] sm:$0xff]
  %v50 = vld [vmem:[%s0 + $0xf0] sm:$0xff]
  %v51 = vld [vmem:[%s0 + $0xf8] sm:$0xff]
  %v52 = vpack.c.bf16 %v21, %v20
  %v53 = vpack.c.bf16 %v23, %v22
  %v54 = vpack.c.bf16 %v25, %v24
  %v55 = vpack.c.bf16 %v27, %v26
  %v56 = vpack.c.bf16 %v29, %v28
  %v57 = vpack.c.bf16 %v31, %v30
  %v58 = vpack.c.bf16 %v33, %v32
  %v59 = vpack.c.bf16 %v35, %v34
  %v60 = vpack.c.bf16 %v37, %v36
  %v61 = vpack.c.bf16 %v39, %v38
  %v62 = vpack.c.bf16 %v41, %v40
  %v63 = vpack.c.bf16 %v43, %v42
  %v64 = vpack.c.bf16 %v45, %v44
  %v65 = vpack.c.bf16 %v47, %v46
  %v66 = vpack.c.bf16 %v49, %v48
  %v67 = vpack.c.bf16 %v51, %v50
  %v68 = vld [vmem:[%s1] sm:$0xf]
  %v69 = vld [vmem:[%s1 + $0x4] sm:$0xf]
  %v70 = vld [vmem:[%s1 + $0x8] sm:$0xf]
  %v71 = vld [vmem:[%s1 + $0xc] sm:$0xf]
  %v72 = vld [vmem:[%s1 + $0x10] sm:$0xf]
  %v73 = vld [vmem:[%s1 + $0x14] sm:$0xf]
  %v74 = vld [vmem:[%s1 + $0x18] sm:$0xf]
  %v75 = vld [vmem:[%s1 + $0x1c] sm:$0xf]
  %v76 = vld [vmem:[%s1 + $0x20] sm:$0xf]
  %v77 = vld [vmem:[%s1 + $0x24] sm:$0xf]
  %v78 = vld [vmem:[%s1 + $0x28] sm:$0xf]
  %v79 = vld [vmem:[%s1 + $0x2c] sm:$0xf]
  %v80 = vld [vmem:[%s1 + $0x30] sm:$0xf]
  %v81 = vld [vmem:[%s1 + $0x34] sm:$0xf]
  %v82 = vld [vmem:[%s1 + $0x38] sm:$0xf]
  %v83 = vld [vmem:[%s1 + $0x3c] sm:$0xf]
  %v84 = vld [vmem:[%s2] sm:$0x1]
  %v86 = vperm.slane %v84, 0
  %v104 = vunpack.c.l.b16 %v68
  %v105 = vunpack.c.l.b16 %v69
  %v106 = vunpack.c.l.b16 %v70
  %v107 = vunpack.c.l.b16 %v71
  %v108 = vunpack.c.l.b16 %v72
  %v109 = vunpack.c.l.b16 %v73
  %v110 = vunpack.c.l.b16 %v74
  %v111 = vunpack.c.l.b16 %v75
  %v112 = vunpack.c.l.b16 %v76
  %v113 = vunpack.c.l.b16 %v77
  %v114 = vunpack.c.l.b16 %v78
  %v115 = vunpack.c.l.b16 %v79
  %v116 = vunpack.c.l.b16 %v80
  %v117 = vunpack.c.l.b16 %v81
  %v118 = vunpack.c.l.b16 %v82
  %v119 = vunpack.c.l.b16 %v83
  %v120 = vpack.c.b16 %v105, %v104
  %v121 = vpack.c.b16 %v107, %v106
  %v122 = vpack.c.b16 %v109, %v108
  %v123 = vpack.c.b16 %v111, %v110
  %v124 = vpack.c.b16 %v113, %v112
  %v125 = vpack.c.b16 %v115, %v114
  %v126 = vpack.c.b16 %v117, %v116
  %v127 = vpack.c.b16 %v119, %v118
  %136 = vmatpush.bf16.msra.mxu0 %v127
  %137 = vmatpush.bf16.msra.mxu0 %v126
  %138 = vmatpush.bf16.msra.mxu0 %v125
  %139 = vmatpush.bf16.msra.mxu0 %v124
  %140 = vmatpush.bf16.msra.mxu0 %v123
  %141 = vmatpush.bf16.msra.mxu0 %v122
  %142 = vmatpush.bf16.msra.mxu0 %v121
  %143 = vmatpush.bf16.msra.mxu0 %v120
  %144 = vmatmul.bf16.gmra.mxu0 %v52
  %v145 = vpop.f32.mrf.mxu0
  %v146 = vadd.f32 %v86, %v145
  %v147 = vpop.f32.mrf.mxu0
  %v148 = vadd.f32 %v86, %v147
  %149 = vmatmul.bf16.gmra.mxu0 %v53
  %v150 = vpop.f32.mrf.mxu0
  %v151 = vadd.f32 %v86, %v150
  %v152 = vpop.f32.mrf.mxu0
  %v153 = vadd.f32 %v86, %v152
  %154 = vmatmul.bf16.gmra.mxu0 %v54
  %v155 = vpop.f32.mrf.mxu0
  %v156 = vadd.f32 %v86, %v155
  %v157 = vpop.f32.mrf.mxu0
  %v158 = vadd.f32 %v86, %v157
  %159 = vmatmul.bf16.gmra.mxu0 %v55
  %v160 = vpop.f32.mrf.mxu0
  %v161 = vadd.f32 %v86, %v160
  %v162 = vpop.f32.mrf.mxu0
  %v163 = vadd.f32 %v86, %v162
  %164 = vmatmul.bf16.gmra.mxu0 %v56
  %v165 = vpop.f32.mrf.mxu0
  %v166 = vadd.f32 %v86, %v165
  %v167 = vpop.f32.mrf.mxu0
  %v168 = vadd.f32 %v86, %v167
  %169 = vmatmul.bf16.gmra.mxu0 %v57
  %v170 = vpop.f32.mrf.mxu0
  %v171 = vadd.f32 %v86, %v170
  %v172 = vpop.f32.mrf.mxu0
  %v173 = vadd.f32 %v86, %v172
  %174 = vmatmul.bf16.gmra.mxu0 %v58
  %v175 = vpop.f32.mrf.mxu0
  %v176 = vadd.f32 %v86, %v175
  %v177 = vpop.f32.mrf.mxu0
  %v178 = vadd.f32 %v86, %v177
  %179 = vmatmul.bf16.gmra.mxu0 %v59
  %v180 = vpop.f32.mrf.mxu0
  %v181 = vadd.f32 %v86, %v180
  %v182 = vpop.f32.mrf.mxu0
  %v183 = vadd.f32 %v86, %v182
  %184 = vmatmul.bf16.gmra.mxu0 %v60
  %v185 = vpop.f32.mrf.mxu0
  %v186 = vadd.f32 %v86, %v185
  %v187 = vpop.f32.mrf.mxu0
  %v188 = vadd.f32 %v86, %v187
  %189 = vmatmul.bf16.gmra.mxu0 %v61
  %v190 = vpop.f32.mrf.mxu0
  %v191 = vadd.f32 %v86, %v190
  %v192 = vpop.f32.mrf.mxu0
  %v193 = vadd.f32 %v86, %v192
  %194 = vmatmul.bf16.gmra.mxu0 %v62
  %v195 = vpop.f32.mrf.mxu0
  %v196 = vadd.f32 %v86, %v195
  %v197 = vpop.f32.mrf.mxu0
  %v198 = vadd.f32 %v86, %v197
  %199 = vmatmul.bf16.gmra.mxu0 %v63
  %v200 = vpop.f32.mrf.mxu0
  %v201 = vadd.f32 %v86, %v200
  %v202 = vpop.f32.mrf.mxu0
  %v203 = vadd.f32 %v86, %v202
  %204 = vmatmul.bf16.gmra.mxu0 %v64
  %v205 = vpop.f32.mrf.mxu0
  %v206 = vadd.f32 %v86, %v205
  %v207 = vpop.f32.mrf.mxu0
  %v208 = vadd.f32 %v86, %v207
  %209 = vmatmul.bf16.gmra.mxu0 %v65
  %v210 = vpop.f32.mrf.mxu0
  %v211 = vadd.f32 %v86, %v210
  %v212 = vpop.f32.mrf.mxu0
  %v213 = vadd.f32 %v86, %v212
  %214 = vmatmul.bf16.gmra.mxu0 %v66
  %v215 = vpop.f32.mrf.mxu0
  %v216 = vadd.f32 %v86, %v215
  %v217 = vpop.f32.mrf.mxu0
  %v218 = vadd.f32 %v86, %v217
  %219 = vmatmul.bf16.gmra.mxu0 %v67
  %v220 = vpop.f32.mrf.mxu0
  %v221 = vadd.f32 %v86, %v220
  %v222 = vpop.f32.mrf.mxu0
  %v223 = vadd.f32 %v86, %v222
  %224 = vdwg.mxu0
  %v225 = vmul.f32 %v146, %v146
  %v226 = vmul.f32 %v148, %v148
  %v227 = vmul.f32 %v151, %v151
  %v228 = vmul.f32 %v153, %v153
  %v229 = vmul.f32 %v156, %v156
  %v230 = vmul.f32 %v158, %v158
  %v231 = vmul.f32 %v161, %v161
  %v232 = vmul.f32 %v163, %v163
  %v233 = vmul.f32 %v166, %v166
  %v234 = vmul.f32 %v168, %v168
  %v235 = vmul.f32 %v171, %v171
  %v236 = vmul.f32 %v173, %v173
  %v237 = vmul.f32 %v176, %v176
  %v238 = vmul.f32 %v178, %v178
  %v239 = vmul.f32 %v181, %v181
  %v240 = vmul.f32 %v183, %v183
  %v241 = vmul.f32 %v186, %v186
  %v242 = vmul.f32 %v188, %v188
  %v243 = vmul.f32 %v191, %v191
  %v244 = vmul.f32 %v193, %v193
  %v245 = vmul.f32 %v196, %v196
  %v246 = vmul.f32 %v198, %v198
  %v247 = vmul.f32 %v201, %v201
  %v248 = vmul.f32 %v203, %v203
  %v249 = vmul.f32 %v206, %v206
  %v250 = vmul.f32 %v208, %v208
  %v251 = vmul.f32 %v211, %v211
  %v252 = vmul.f32 %v213, %v213
  %v253 = vmul.f32 %v216, %v216
  %v254 = vmul.f32 %v218, %v218
  %v255 = vmul.f32 %v221, %v221
  %v256 = vmul.f32 %v223, %v223
  %v257 = vmul.f32 %v146, %v225
  %v258 = vmul.f32 %v148, %v226
  %v259 = vmul.f32 %v151, %v227
  %v260 = vmul.f32 %v153, %v228
  %v261 = vmul.f32 %v156, %v229
  %v262 = vmul.f32 %v158, %v230
  %v263 = vmul.f32 %v161, %v231
  %v264 = vmul.f32 %v163, %v232
  %v265 = vmul.f32 %v166, %v233
  %v266 = vmul.f32 %v168, %v234
  %v267 = vmul.f32 %v171, %v235
  %v268 = vmul.f32 %v173, %v236
  %v269 = vmul.f32 %v176, %v237
  %v270 = vmul.f32 %v178, %v238
  %v271 = vmul.f32 %v181, %v239
  %v272 = vmul.f32 %v183, %v240
  %v273 = vmul.f32 %v186, %v241
  %v274 = vmul.f32 %v188, %v242
  %v275 = vmul.f32 %v191, %v243
  %v276 = vmul.f32 %v193, %v244
  %v277 = vmul.f32 %v196, %v245
  %v278 = vmul.f32 %v198, %v246
  %v279 = vmul.f32 %v201, %v247
  %v280 = vmul.f32 %v203, %v248
  %v281 = vmul.f32 %v206, %v249
  %v282 = vmul.f32 %v208, %v250
  %v283 = vmul.f32 %v211, %v251
  %v284 = vmul.f32 %v213, %v252
  %v285 = vmul.f32 %v216, %v253
  %v286 = vmul.f32 %v218, %v254
  %v287 = vmul.f32 %v221, %v255
  %v288 = vmul.f32 %v223, %v256
  %v289 = vmul.f32 %v257, 0.044715
  %v290 = vmul.f32 %v258, 0.044715
  %v291 = vmul.f32 %v259, 0.044715
  %v292 = vmul.f32 %v260, 0.044715
  %v293 = vmul.f32 %v261, 0.044715
  %v294 = vmul.f32 %v262, 0.044715
  %v295 = vmul.f32 %v263, 0.044715
  %v296 = vmul.f32 %v264, 0.044715
  %v297 = vmul.f32 %v265, 0.044715
  %v298 = vmul.f32 %v266, 0.044715
  %v299 = vmul.f32 %v267, 0.044715
  %v300 = vmul.f32 %v268, 0.044715
  %v301 = vmul.f32 %v269, 0.044715
  %v302 = vmul.f32 %v270, 0.044715
  %v303 = vmul.f32 %v271, 0.044715
  %v304 = vmul.f32 %v272, 0.044715
  %v305 = vmul.f32 %v273, 0.044715
  %v306 = vmul.f32 %v274, 0.044715
  %v307 = vmul.f32 %v275, 0.044715
  %v308 = vmul.f32 %v276, 0.044715
  %v309 = vmul.f32 %v277, 0.044715
  %v310 = vmul.f32 %v278, 0.044715
  %v311 = vmul.f32 %v279, 0.044715
  %v312 = vmul.f32 %v280, 0.044715
  %v313 = vmul.f32 %v281, 0.044715
  %v314 = vmul.f32 %v282, 0.044715
  %v315 = vmul.f32 %v283, 0.044715
  %v316 = vmul.f32 %v284, 0.044715
  %v317 = vmul.f32 %v285, 0.044715
  %v318 = vmul.f32 %v286, 0.044715
  %v319 = vmul.f32 %v287, 0.044715
  %v320 = vmul.f32 %v288, 0.044715
  %v321 = vadd.f32 %v146, %v289
  %v322 = vadd.f32 %v148, %v290
  %v323 = vadd.f32 %v151, %v291
  %v324 = vadd.f32 %v153, %v292
  %v325 = vadd.f32 %v156, %v293
  %v326 = vadd.f32 %v158, %v294
  %v327 = vadd.f32 %v161, %v295
  %v328 = vadd.f32 %v163, %v296
  %v329 = vadd.f32 %v166, %v297
  %v330 = vadd.f32 %v168, %v298
  %v331 = vadd.f32 %v171, %v299
  %v332 = vadd.f32 %v173, %v300
  %v333 = vadd.f32 %v176, %v301
  %v334 = vadd.f32 %v178, %v302
  %v335 = vadd.f32 %v181, %v303
  %v336 = vadd.f32 %v183, %v304
  %v337 = vadd.f32 %v186, %v305
  %v338 = vadd.f32 %v188, %v306
  %v339 = vadd.f32 %v191, %v307
  %v340 = vadd.f32 %v193, %v308
  %v341 = vadd.f32 %v196, %v309
  %v342 = vadd.f32 %v198, %v310
  %v343 = vadd.f32 %v201, %v311
  %v344 = vadd.f32 %v203, %v312
  %v345 = vadd.f32 %v206, %v313
  %v346 = vadd.f32 %v208, %v314
  %v347 = vadd.f32 %v211, %v315
  %v348 = vadd.f32 %v213, %v316
  %v349 = vadd.f32 %v216, %v317
  %v350 = vadd.f32 %v218, %v318
  %v351 = vadd.f32 %v221, %v319
  %v352 = vadd.f32 %v223, %v320
  %v353 = vmul.f32 %v321, 0.7978846
  %v354 = vmul.f32 %v322, 0.7978846
  %v355 = vmul.f32 %v323, 0.7978846
  %v356 = vmul.f32 %v324, 0.7978846
  %v357 = vmul.f32 %v325, 0.7978846
  %v358 = vmul.f32 %v326, 0.7978846
  %v359 = vmul.f32 %v327, 0.7978846
  %v360 = vmul.f32 %v328, 0.7978846
  %v361 = vmul.f32 %v329, 0.7978846
  %v362 = vmul.f32 %v330, 0.7978846
  %v363 = vmul.f32 %v331, 0.7978846
  %v364 = vmul.f32 %v332, 0.7978846
  %v365 = vmul.f32 %v333, 0.7978846
  %v366 = vmul.f32 %v334, 0.7978846
  %v367 = vmul.f32 %v335, 0.7978846
  %v368 = vmul.f32 %v336, 0.7978846
  %v369 = vmul.f32 %v337, 0.7978846
  %v370 = vmul.f32 %v338, 0.7978846
  %v371 = vmul.f32 %v339, 0.7978846
  %v372 = vmul.f32 %v340, 0.7978846
  %v373 = vmul.f32 %v341, 0.7978846
  %v374 = vmul.f32 %v342, 0.7978846
  %v375 = vmul.f32 %v343, 0.7978846
  %v376 = vmul.f32 %v344, 0.7978846
  %v377 = vmul.f32 %v345, 0.7978846
  %v378 = vmul.f32 %v346, 0.7978846
  %v379 = vmul.f32 %v347, 0.7978846
  %v380 = vmul.f32 %v348, 0.7978846
  %v381 = vmul.f32 %v349, 0.7978846
  %v382 = vmul.f32 %v350, 0.7978846
  %v383 = vmul.f32 %v351, 0.7978846
  %v384 = vmul.f32 %v352, 0.7978846
  %v385 = vtanh.pop %v353
  %v386 = vtanh.pop %v354
  %v387 = vtanh.pop %v355
  %v388 = vtanh.pop %v356
  %v389 = vtanh.pop %v357
  %v390 = vtanh.pop %v358
  %v391 = vtanh.pop %v359
  %v392 = vtanh.pop %v360
  %v393 = vtanh.pop %v361
  %v394 = vtanh.pop %v362
  %v395 = vtanh.pop %v363
  %v396 = vtanh.pop %v364
  %v397 = vtanh.pop %v365
  %v398 = vtanh.pop %v366
  %v399 = vtanh.pop %v367
  %v400 = vtanh.pop %v368
  %v401 = vtanh.pop %v369
  %v402 = vtanh.pop %v370
  %v403 = vtanh.pop %v371
  %v404 = vtanh.pop %v372
  %v405 = vtanh.pop %v373
  %v406 = vtanh.pop %v374
  %v407 = vtanh.pop %v375
  %v408 = vtanh.pop %v376
  %v409 = vtanh.pop %v377
  %v410 = vtanh.pop %v378
  %v411 = vtanh.pop %v379
  %v412 = vtanh.pop %v380
  %v413 = vtanh.pop %v381
  %v414 = vtanh.pop %v382
  %v415 = vtanh.pop %v383
  %v416 = vtanh.pop %v384
  %v417 = vadd.f32 %v385, 1.0
  %v418 = vadd.f32 %v386, 1.0
  %v419 = vadd.f32 %v387, 1.0
  %v420 = vadd.f32 %v388, 1.0
  %v421 = vadd.f32 %v389, 1.0
  %v422 = vadd.f32 %v390, 1.0
  %v423 = vadd.f32 %v391, 1.0
  %v424 = vadd.f32 %v392, 1.0
  %v425 = vadd.f32 %v393, 1.0
  %v426 = vadd.f32 %v394, 1.0
  %v427 = vadd.f32 %v395, 1.0
  %v428 = vadd.f32 %v396, 1.0
  %v429 = vadd.f32 %v397, 1.0
  %v430 = vadd.f32 %v398, 1.0
  %v431 = vadd.f32 %v399, 1.0
  %v432 = vadd.f32 %v400, 1.0
  %v433 = vadd.f32 %v401, 1.0
  %v434 = vadd.f32 %v402, 1.0
  %v435 = vadd.f32 %v403, 1.0
  %v436 = vadd.f32 %v404, 1.0
  %v437 = vadd.f32 %v405, 1.0
  %v438 = vadd.f32 %v406, 1.0
  %v439 = vadd.f32 %v407, 1.0
  %v440 = vadd.f32 %v408, 1.0
  %v441 = vadd.f32 %v409, 1.0
  %v442 = vadd.f32 %v410, 1.0
  %v443 = vadd.f32 %v411, 1.0
  %v444 = vadd.f32 %v412, 1.0
  %v445 = vadd.f32 %v413, 1.0
  %v446 = vadd.f32 %v414, 1.0
  %v447 = vadd.f32 %v415, 1.0
  %v448 = vadd.f32 %v416, 1.0
  %v449 = vmul.f32 %v417, 0.5
  %v450 = vmul.f32 %v418, 0.5
  %v451 = vmul.f32 %v419, 0.5
  %v452 = vmul.f32 %v420, 0.5
  %v453 = vmul.f32 %v421, 0.5
  %v454 = vmul.f32 %v422, 0.5
  %v455 = vmul.f32 %v423, 0.5
  %v456 = vmul.f32 %v424, 0.5
  %v457 = vmul.f32 %v425, 0.5
  %v458 = vmul.f32 %v426, 0.5
  %v459 = vmul.f32 %v427, 0.5
  %v460 = vmul.f32 %v428, 0.5
  %v461 = vmul.f32 %v429, 0.5
  %v462 = vmul.f32 %v430, 0.5
  %v463 = vmul.f32 %v431, 0.5
  %v464 = vmul.f32 %v432, 0.5
  %v465 = vmul.f32 %v433, 0.5
  %v466 = vmul.f32 %v434, 0.5
  %v467 = vmul.f32 %v435, 0.5
  %v468 = vmul.f32 %v436, 0.5
  %v469 = vmul.f32 %v437, 0.5
  %v470 = vmul.f32 %v438, 0.5
  %v471 = vmul.f32 %v439, 0.5
  %v472 = vmul.f32 %v440, 0.5
  %v473 = vmul.f32 %v441, 0.5
  %v474 = vmul.f32 %v442, 0.5
  %v475 = vmul.f32 %v443, 0.5
  %v476 = vmul.f32 %v444, 0.5
  %v477 = vmul.f32 %v445, 0.5
  %v478 = vmul.f32 %v446, 0.5
  %v479 = vmul.f32 %v447, 0.5
  %v480 = vmul.f32 %v448, 0.5
  %v481 = vmul.f32 %v146, %v449
  %v482 = vmul.f32 %v148, %v450
  %v483 = vmul.f32 %v151, %v451
  %v484 = vmul.f32 %v153, %v452
  %v485 = vmul.f32 %v156, %v453
  %v486 = vmul.f32 %v158, %v454
  %v487 = vmul.f32 %v161, %v455
  %v488 = vmul.f32 %v163, %v456
  %v489 = vmul.f32 %v166, %v457
  %v490 = vmul.f32 %v168, %v458
  %v491 = vmul.f32 %v171, %v459
  %v492 = vmul.f32 %v173, %v460
  %v493 = vmul.f32 %v176, %v461
  %v494 = vmul.f32 %v178, %v462
  %v495 = vmul.f32 %v181, %v463
  %v496 = vmul.f32 %v183, %v464
  %v497 = vmul.f32 %v186, %v465
  %v498 = vmul.f32 %v188, %v466
  %v499 = vmul.f32 %v191, %v467
  %v500 = vmul.f32 %v193, %v468
  %v501 = vmul.f32 %v196, %v469
  %v502 = vmul.f32 %v198, %v470
  %v503 = vmul.f32 %v201, %v471
  %v504 = vmul.f32 %v203, %v472
  %v505 = vmul.f32 %v206, %v473
  %v506 = vmul.f32 %v208, %v474
  %v507 = vmul.f32 %v211, %v475
  %v508 = vmul.f32 %v213, %v476
  %v509 = vmul.f32 %v216, %v477
  %v510 = vmul.f32 %v218, %v478
  %v511 = vmul.f32 %v221, %v479
  %v512 = vmul.f32 %v223, %v480
  %v513 = vpack.c.bf16 %v482, %v481
  %v514 = vpack.c.bf16 %v484, %v483
  %v515 = vpack.c.bf16 %v486, %v485
  %v516 = vpack.c.bf16 %v488, %v487
  %v517 = vpack.c.bf16 %v490, %v489
  %v518 = vpack.c.bf16 %v492, %v491
  %v519 = vpack.c.bf16 %v494, %v493
  %v520 = vpack.c.bf16 %v496, %v495
  %v521 = vpack.c.bf16 %v498, %v497
  %v522 = vpack.c.bf16 %v500, %v499
  %v523 = vpack.c.bf16 %v502, %v501
  %v524 = vpack.c.bf16 %v504, %v503
  %v525 = vpack.c.bf16 %v506, %v505
  %v526 = vpack.c.bf16 %v508, %v507
  %v527 = vpack.c.bf16 %v510, %v509
  %v528 = vpack.c.bf16 %v512, %v511
  %v529 = vld [vmem:[%s3] sm:$0xf]
  %v530 = vld [vmem:[%s3 + $0x4] sm:$0xf]
  %v531 = vld [vmem:[%s3 + $0x8] sm:$0xf]
  %v532 = vld [vmem:[%s3 + $0xc] sm:$0xf]
  %v533 = vld [vmem:[%s3 + $0x10] sm:$0xf]
  %v534 = vld [vmem:[%s3 + $0x14] sm:$0xf]
  %v535 = vld [vmem:[%s3 + $0x18] sm:$0xf]
  %v536 = vld [vmem:[%s3 + $0x1c] sm:$0xf]
  %v537 = vld [vmem:[%s3 + $0x20] sm:$0xf]
  %v538 = vld [vmem:[%s3 + $0x24] sm:$0xf]
  %v539 = vld [vmem:[%s3 + $0x28] sm:$0xf]
  %v540 = vld [vmem:[%s3 + $0x2c] sm:$0xf]
  %v541 = vld [vmem:[%s3 + $0x30] sm:$0xf]
  %v542 = vld [vmem:[%s3 + $0x34] sm:$0xf]
  %v543 = vld [vmem:[%s3 + $0x38] sm:$0xf]
  %v544 = vld [vmem:[%s3 + $0x3c] sm:$0xf]
  %v545 = vld [vmem:[%s4] sm:$0x1]
  %v547 = vperm.slane %v545, 0
  %v565 = vunpack.c.l.b16 %v529
  %v566 = vunpack.c.l.b16 %v530
  %v567 = vunpack.c.l.b16 %v531
  %v568 = vunpack.c.l.b16 %v532
  %v569 = vunpack.c.l.b16 %v533
  %v570 = vunpack.c.l.b16 %v534
  %v571 = vunpack.c.l.b16 %v535
  %v572 = vunpack.c.l.b16 %v536
  %v573 = vunpack.c.l.b16 %v537
  %v574 = vunpack.c.l.b16 %v538
  %v575 = vunpack.c.l.b16 %v539
  %v576 = vunpack.c.l.b16 %v540
  %v577 = vunpack.c.l.b16 %v541
  %v578 = vunpack.c.l.b16 %v542
  %v579 = vunpack.c.l.b16 %v543
  %v580 = vunpack.c.l.b16 %v544
  %v581 = vpack.c.b16 %v566, %v565
  %v582 = vpack.c.b16 %v568, %v567
  %v583 = vpack.c.b16 %v570, %v569
  %v584 = vpack.c.b16 %v572, %v571
  %v585 = vpack.c.b16 %v574, %v573
  %v586 = vpack.c.b16 %v576, %v575
  %v587 = vpack.c.b16 %v578, %v577
  %v588 = vpack.c.b16 %v580, %v579
  %597 = vmatpush.bf16.msra.mxu0 %v588
  %598 = vmatpush.bf16.msra.mxu0 %v587
  %599 = vmatpush.bf16.msra.mxu0 %v586
  %600 = vmatpush.bf16.msra.mxu0 %v585
  %601 = vmatpush.bf16.msra.mxu0 %v584
  %602 = vmatpush.bf16.msra.mxu0 %v583
  %603 = vmatpush.bf16.msra.mxu0 %v582
  %604 = vmatpush.bf16.msra.mxu0 %v581
  %605 = vmatmul.bf16.gmra.mxu0 %v513
  %v606 = vpop.f32.mrf.mxu0
  %v607 = vadd.f32 %v547, %v606
  %v608 = vpop.f32.mrf.mxu0
  %v609 = vadd.f32 %v547, %v608
  %610 = vmatmul.bf16.gmra.mxu0 %v514
  %v611 = vpop.f32.mrf.mxu0
  %v612 = vadd.f32 %v547, %v611
  %v613 = vpop.f32.mrf.mxu0
  %v614 = vadd.f32 %v547, %v613
  %615 = vmatmul.bf16.gmra.mxu0 %v515
  %v616 = vpop.f32.mrf.mxu0
  %v617 = vadd.f32 %v547, %v616
  %v618 = vpop.f32.mrf.mxu0
  %v619 = vadd.f32 %v547, %v618
  %620 = vmatmul.bf16.gmra.mxu0 %v516
  %v621 = vpop.f32.mrf.mxu0
  %v622 = vadd.f32 %v547, %v621
  %v623 = vpop.f32.mrf.mxu0
  %v624 = vadd.f32 %v547, %v623
  %625 = vmatmul.bf16.gmra.mxu0 %v517
  %v626 = vpop.f32.mrf.mxu0
  %v627 = vadd.f32 %v547, %v626
  %v628 = vpop.f32.mrf.mxu0
  %v629 = vadd.f32 %v547, %v628
  %630 = vmatmul.bf16.gmra.mxu0 %v518
  %v631 = vpop.f32.mrf.mxu0
  %v632 = vadd.f32 %v547, %v631
  %v633 = vpop.f32.mrf.mxu0
  %v634 = vadd.f32 %v547, %v633
  %635 = vmatmul.bf16.gmra.mxu0 %v519
  %v636 = vpop.f32.mrf.mxu0
  %v637 = vadd.f32 %v547, %v636
  %v638 = vpop.f32.mrf.mxu0
  %v639 = vadd.f32 %v547, %v638
  %640 = vmatmul.bf16.gmra.mxu0 %v520
  %v641 = vpop.f32.mrf.mxu0
  %v642 = vadd.f32 %v547, %v641
  %v643 = vpop.f32.mrf.mxu0
  %v644 = vadd.f32 %v547, %v643
  %645 = vmatmul.bf16.gmra.mxu0 %v521
  %v646 = vpop.f32.mrf.mxu0
  %v647 = vadd.f32 %v547, %v646
  %v648 = vpop.f32.mrf.mxu0
  %v649 = vadd.f32 %v547, %v648
  %650 = vmatmul.bf16.gmra.mxu0 %v522
  %v651 = vpop.f32.mrf.mxu0
  %v652 = vadd.f32 %v547, %v651
  %v653 = vpop.f32.mrf.mxu0
  %v654 = vadd.f32 %v547, %v653
  %655 = vmatmul.bf16.gmra.mxu0 %v523
  %v656 = vpop.f32.mrf.mxu0
  %v657 = vadd.f32 %v547, %v656
  %v658 = vpop.f32.mrf.mxu0
  %v659 = vadd.f32 %v547, %v658
  %660 = vmatmul.bf16.gmra.mxu0 %v524
  %v661 = vpop.f32.mrf.mxu0
  %v662 = vadd.f32 %v547, %v661
  %v663 = vpop.f32.mrf.mxu0
  %v664 = vadd.f32 %v547, %v663
  %665 = vmatmul.bf16.gmra.mxu0 %v525
  %v666 = vpop.f32.mrf.mxu0
  %v667 = vadd.f32 %v547, %v666
  %v668 = vpop.f32.mrf.mxu0
  %v669 = vadd.f32 %v547, %v668
  %670 = vmatmul.bf16.gmra.mxu0 %v526
  %v671 = vpop.f32.mrf.mxu0
  %v672 = vadd.f32 %v547, %v671
  %v673 = vpop.f32.mrf.mxu0
  %v674 = vadd.f32 %v547, %v673
  %675 = vmatmul.bf16.gmra.mxu0 %v527
  %v676 = vpop.f32.mrf.mxu0
  %v677 = vadd.f32 %v547, %v676
  %v678 = vpop.f32.mrf.mxu0
  %v679 = vadd.f32 %v547, %v678
  %680 = vmatmul.bf16.gmra.mxu0 %v528
  %v681 = vpop.f32.mrf.mxu0
  %v682 = vadd.f32 %v547, %v681
  %v683 = vpop.f32.mrf.mxu0
  %v684 = vadd.f32 %v547, %v683
  %685 = vdwg.mxu0
  %v686 = vadd.f32 %v607, %v20
  %v687 = vadd.f32 %v609, %v21
  %v688 = vadd.f32 %v612, %v22
  %v689 = vadd.f32 %v614, %v23
  %v690 = vadd.f32 %v617, %v24
  %v691 = vadd.f32 %v619, %v25
  %v692 = vadd.f32 %v622, %v26
  %v693 = vadd.f32 %v624, %v27
  %v694 = vadd.f32 %v627, %v28
  %v695 = vadd.f32 %v629, %v29
  %v696 = vadd.f32 %v632, %v30
  %v697 = vadd.f32 %v634, %v31
  %v698 = vadd.f32 %v637, %v32
  %v699 = vadd.f32 %v639, %v33
  %v700 = vadd.f32 %v642, %v34
  %v701 = vadd.f32 %v644, %v35
  %v702 = vadd.f32 %v647, %v36
  %v703 = vadd.f32 %v649, %v37
  %v704 = vadd.f32 %v652, %v38
  %v705 = vadd.f32 %v654, %v39
  %v706 = vadd.f32 %v657, %v40
  %v707 = vadd.f32 %v659, %v41
  %v708 = vadd.f32 %v662, %v42
  %v709 = vadd.f32 %v664, %v43
  %v710 = vadd.f32 %v667, %v44
  %v711 = vadd.f32 %v669, %v45
  %v712 = vadd.f32 %v672, %v46
  %v713 = vadd.f32 %v674, %v47
  %v714 = vadd.f32 %v677, %v48
  %v715 = vadd.f32 %v679, %v49
  %v716 = vadd.f32 %v682, %v50
  %v717 = vadd.f32 %v684, %v51
  %718 = vst [vmem:[%s5] sm:$0xff] %v686
  %719 = vst [vmem:[%s5 + $0x8] sm:$0xff] %v687
  %720 = vst [vmem:[%s5 + $0x10] sm:$0xff] %v688
  %721 = vst [vmem:[%s5 + $0x18] sm:$0xff] %v689
  %722 = vst [vmem:[%s5 + $0x20] sm:$0xff] %v690
  %723 = vst [vmem:[%s5 + $0x28] sm:$0xff] %v691
  %724 = vst [vmem:[%s5 + $0x30] sm:$0xff] %v692
  %725 = vst [vmem:[%s5 + $0x38] sm:$0xff] %v693
  %726 = vst [vmem:[%s5 + $0x40] sm:$0xff] %v694
  %727 = vst [vmem:[%s5 + $0x48] sm:$0xff] %v695
  %728 = vst [vmem:[%s5 + $0x50] sm:$0xff] %v696
  %729 = vst [vmem:[%s5 + $0x58] sm:$0xff] %v697
  %730 = vst [vmem:[%s5 + $0x60] sm:$0xff] %v698
  %731 = vst [vmem:[%s5 + $0x68] sm:$0xff] %v699
  %732 = vst [vmem:[%s5 + $0x70] sm:$0xff] %v700
  %733 = vst [vmem:[%s5 + $0x78] sm:$0xff] %v701
  %734 = vst [vmem:[%s5 + $0x80] sm:$0xff] %v702
  %735 = vst [vmem:[%s5 + $0x88] sm:$0xff] %v703
  %736 = vst [vmem:[%s5 + $0x90] sm:$0xff] %v704
  %737 = vst [vmem:[%s5 + $0x98] sm:$0xff] %v705
  %738 = vst [vmem:[%s5 + $0xa0] sm:$0xff] %v706
  %739 = vst [vmem:[%s5 + $0xa8] sm:$0xff] %v707
  %740 = vst [vmem:[%s5 + $0xb0] sm:$0xff] %v708
  %741 = vst [vmem:[%s5 + $0xb8] sm:$0xff] %v709
  %742 = vst [vmem:[%s5 + $0xc0] sm:$0xff] %v710
  %743 = vst [vmem:[%s5 + $0xc8] sm:$0xff] %v711
  %744 = vst [vmem:[%s5 + $0xd0] sm:$0xff] %v712
  %745 = vst [vmem:[%s5 + $0xd8] sm:$0xff] %v713
  %746 = vst [vmem:[%s5 + $0xe0] sm:$0xff] %v714
  %747 = vst [vmem:[%s5 + $0xe8] sm:$0xff] %v715
  %748 = vst [vmem:[%s5 + $0xf0] sm:$0xff] %v716
  %749 = vst [vmem:[%s5 + $0xf8] sm:$0xff] %v717
  // Predicated region
  $region22: #{_residual_ff_impl.1} parent=0 // pred_check
    _
  $region23: #{_residual_ff_impl.1} parent=0 // pred_check_branch
    %751 = sbr.rel (0) target = $region25
  $region24: #{_residual_ff_impl.1} parent=0 // pred_region
    _
  $region25: #{_residual_ff_impl.1} parent=0 // pred_fallthru
    _
  // Predicated region
  $region26: #{_residual_ff_impl.1} parent=0 // pred_check
    _
  $region27: #{_residual_ff_impl.1} parent=0 // pred_check_branch
    %753 = sbr.rel (0) target = $region29
  $region28: #{_residual_ff_impl.1} parent=0 // pred_region
    _
  $region29: #{_residual_ff_impl.1} parent=0 // pred_fallthru
    _

</llo_original>
